<compile_context>
chip_gen: v7x
topology: tpu7x:2x2x1
jax: 0.10.0
libtpu: 0.0.40
codegen_flags: <defaults>
</compile_context>

<pallas_src>
import functools
import math

import jax
import jax.numpy as jnp
from jax.experimental import pallas as pl
from jax.experimental.pallas import tpu as pltpu


# ---------------------------------------------------------------------------
# Tiling helpers
# ---------------------------------------------------------------------------
def _row_tile(rows, max_tile=512):
    """Largest power-of-two row tile (>=8) that divides `rows`, capped so the
    row axis gets at least two grid steps (keeps both v7x TCs busy)."""
    if rows % 8 != 0:
        return rows
    cap = min(max_tile, max(8, rows // 2))
    t = 8
    while t * 2 <= cap and rows % (t * 2) == 0:
        t *= 2
    return t


def _col_tile(cols, max_tile=256):
    """Lane-aligned tile for the FFN hidden axis (bounds resident w1/w2 VMEM)."""
    if cols % 128 != 0 or cols <= max_tile:
        return cols
    t = 128
    while t * 2 <= max_tile and cols % (t * 2) == 0:
        t *= 2
    return t


# ---------------------------------------------------------------------------
# Kernel A: per-batch fused q/k/v projection (block-diag, lane-dense) + attention
# ---------------------------------------------------------------------------
def _attn_kernel(q_ref, k_ref, v_ref, wq_ref, bq_ref, wk_ref, bk_ref,
                 wv_ref, bv_ref, o_ref, *, n_heads, head_dim, scale):
    qx = q_ref[...].astype(jnp.bfloat16)          # (Sq, E)
    kx = k_ref[...].astype(jnp.bfloat16)          # (S,  E)
    vx = v_ref[...].astype(jnp.bfloat16)          # (S,  E)

    # Block-diagonal folded per-head Linear layers: one 128-wide matmul each.
    q = jnp.dot(qx, wq_ref[...], preferred_element_type=jnp.float32) + bq_ref[...]
    k = jnp.dot(kx, wk_ref[...], preferred_element_type=jnp.float32) + bk_ref[...]
    v = jnp.dot(vx, wv_ref[...], preferred_element_type=jnp.float32) + bv_ref[...]

    ctx_heads = []
    for h in range(n_heads):                      # static unrolled head loop
        sl = slice(h * head_dim, (h + 1) * head_dim)
        qh = q[:, sl].astype(jnp.bfloat16)
        kh = k[:, sl].astype(jnp.bfloat16)
        vh = v[:, sl].astype(jnp.bfloat16)
        s = jax.lax.dot_general(qh, kh, (((1,), (1,)), ((), ())),
                                preferred_element_type=jnp.float32) * scale   # (Sq, S)
        m = jnp.max(s, axis=-1, keepdims=True)
        p = jnp.exp(s - m)
        p = p * pl.reciprocal(jnp.sum(p, axis=-1, keepdims=True), approx=True)
        ctx_heads.append(
            jnp.dot(p.astype(jnp.bfloat16), vh, preferred_element_type=jnp.float32))

    # Single lane-dense (Sq, E) store of the head concat.
    o_ref[...] = jnp.concatenate(ctx_heads, axis=-1).astype(o_ref.dtype)


def _mha_attention(query_x, key_x, value_x, wq, bq, wk, bk, wv, bv,
                   n_heads, head_dim, scale):
    B, Sq, E = query_x.shape
    S = key_x.shape[1]
    kernel = functools.partial(_attn_kernel, n_heads=n_heads,
                               head_dim=head_dim, scale=scale)
    return pl.pallas_call(
        kernel,
        out_shape=jax.ShapeDtypeStruct((B, Sq, E), jnp.float32),
        grid_spec=pltpu.PrefetchScalarGridSpec(
            num_scalar_prefetch=0,
            grid=(B,),
            in_specs=[
                pl.BlockSpec((None, Sq, E), lambda b: (b, 0, 0)),
                pl.BlockSpec((None, S, E), lambda b: (b, 0, 0)),
                pl.BlockSpec((None, S, E), lambda b: (b, 0, 0)),
                pl.BlockSpec((E, E), lambda b: (0, 0)),
                pl.BlockSpec((1, E), lambda b: (0, 0)),
                pl.BlockSpec((E, E), lambda b: (0, 0)),
                pl.BlockSpec((1, E), lambda b: (0, 0)),
                pl.BlockSpec((E, E), lambda b: (0, 0)),
                pl.BlockSpec((1, E), lambda b: (0, 0)),
            ],
            out_specs=pl.BlockSpec((None, Sq, E), lambda b: (b, 0, 0)),
        ),
        compiler_params=pltpu.CompilerParams(dimension_semantics=("parallel",)),
    )(query_x, key_x, value_x, wq, bq, wk, bk, wv, bv)


# ---------------------------------------------------------------------------
# Kernel B+C (fused): out-proj + residual(value) + LN1 + FFN + residual + LN2
#   grid = (row tiles [parallel], FFN-hidden tiles [arbitrary])
# ---------------------------------------------------------------------------
def _mlp_ln_kernel(cat_ref, val_ref, wo_ref, bo_ref, g1_ref, be1_ref,
                   w1_ref, b1_ref, w2_ref, b2_ref, g2_ref, be2_ref,
                   o_ref, x1_ref, acc_ref, *, eps):
    f = pl.program_id(1)

    @pl.when(f == 0)
    def _():
        # out-projection + residual(value) + LayerNorm1 (stats in f32)
        cat = cat_ref[...].astype(jnp.bfloat16)
        y = jnp.dot(cat, wo_ref[...], preferred_element_type=jnp.float32) + bo_ref[...]
        y = y + val_ref[...].astype(jnp.float32)
        mean = jnp.mean(y, axis=-1, keepdims=True)
        cen = y - mean
        var = jnp.mean(cen * cen, axis=-1, keepdims=True)
        x1_ref[...] = (cen * jax.lax.rsqrt(var + eps)) * g1_ref[...] + be1_ref[...]
        acc_ref[...] = jnp.zeros_like(acc_ref)

    # FFN partial over this hidden-axis tile (accumulated in VMEM scratch).
    x1 = x1_ref[...]
    h = jnp.dot(x1.astype(jnp.bfloat16), w1_ref[...],
                preferred_element_type=jnp.float32) + b1_ref[...]
    h = jnp.maximum(h, 0.0)
    acc_ref[...] += jnp.dot(h.astype(jnp.bfloat16), w2_ref[...],
                            preferred_element_type=jnp.float32)

    @pl.when(f == pl.num_programs(1) - 1)
    def _():
        y = acc_ref[...] + b2_ref[...] + x1_ref[...]
        mean = jnp.mean(y, axis=-1, keepdims=True)
        cen = y - mean
        var = jnp.mean(cen * cen, axis=-1, keepdims=True)
        o_ref[...] = ((cen * jax.lax.rsqrt(var + eps)) * g2_ref[...]
                      + be2_ref[...]).astype(o_ref.dtype)


def _out_ffn_layernorm(cat2d, val2d, wo, bo, g1, be1, w1, b1, w2, b2, g2, be2,
                       eps, max_row_tile=512, max_hf_tile=256):
    R, E = cat2d.shape
    Hf = w1.shape[1]
    tr = _row_tile(R, max_row_tile)
    tf = _col_tile(Hf, max_hf_tile)
    return pl.pallas_call(
        functools.partial(_mlp_ln_kernel, eps=eps),
        out_shape=jax.ShapeDtypeStruct((R, E), jnp.float32),
        grid_spec=pltpu.PrefetchScalarGridSpec(
            num_scalar_prefetch=0,
            grid=(R // tr, Hf // tf),
            in_specs=[
                pl.BlockSpec((tr, E), lambda r, f: (r, 0)),      # concat rows
                pl.BlockSpec((tr, E), lambda r, f: (r, 0)),      # value residual rows
                pl.BlockSpec((E, E), lambda r, f: (0, 0)),       # wo (bf16)
                pl.BlockSpec((1, E), lambda r, f: (0, 0)),       # bo
                pl.BlockSpec((1, E), lambda r, f: (0, 0)),       # gamma1
                pl.BlockSpec((1, E), lambda r, f: (0, 0)),       # beta1
                pl.BlockSpec((E, tf), lambda r, f: (0, f)),      # w1 tile (bf16)
                pl.BlockSpec((1, tf), lambda r, f: (0, f)),      # b1 tile
                pl.BlockSpec((tf, E), lambda r, f: (f, 0)),      # w2 tile (bf16)
                pl.BlockSpec((1, E), lambda r, f: (0, 0)),       # b2
                pl.BlockSpec((1, E), lambda r, f: (0, 0)),       # gamma2
                pl.BlockSpec((1, E), lambda r, f: (0, 0)),       # beta2
            ],
            out_specs=pl.BlockSpec((tr, E), lambda r, f: (r, 0)),
            scratch_shapes=[pltpu.VMEM((tr, E), jnp.float32),    # x1 (post-LN1)
                            pltpu.VMEM((tr, E), jnp.float32)],   # FFN accumulator
        ),
        compiler_params=pltpu.CompilerParams(
            dimension_semantics=("parallel", "arbitrary")),
    )(cat2d, val2d, wo, bo, g1, be1, w1, b1, w2, b2, g2, be2)


# ---------------------------------------------------------------------------
# Wrapper: full TransformerBlock forward
# ---------------------------------------------------------------------------
def prepare_block_params(params, n_heads):
    """One-time layout plumbing: fold per-head Linear layers into block-diagonal
    (E, E) weights, tile per-head biases to full width, and pre-cast matmul
    weights to bf16 (MXU-native operands)."""
    eye = jnp.eye(n_heads, dtype=jnp.float32)
    bd = lambda w: jnp.kron(eye, w)
    return dict(
        wq=bd(params["wq"]).astype(jnp.bfloat16),
        wk=bd(params["wk"]).astype(jnp.bfloat16),
        wv=bd(params["wv"]).astype(jnp.bfloat16),
        bq=jnp.tile(params["bq"], (1, n_heads)),
        bk=jnp.tile(params["bk"], (1, n_heads)),
        bv=jnp.tile(params["bv"], (1, n_heads)),
        wo=params["wo"].astype(jnp.bfloat16), bo=params["bo"],
        w1=params["w1"].astype(jnp.bfloat16), b1=params["b1"],
        w2=params["w2"].astype(jnp.bfloat16), b2=params["b2"],
        gamma1=params["gamma1"], beta1=params["beta1"],
        gamma2=params["gamma2"], beta2=params["beta2"],
    )


def transformer_block_forward(key_x, query_x, value_x, prep, n_heads,
                              mask=None, eps=1e-5):
    # TODO(synk): mask != None path (masked_fill before scaling) not implemented.
    assert mask is None
    B, S, E = key_x.shape
    Sq = query_x.shape[1]
    assert Sq == S, "residual `x + value` requires seq_len_query == seq_len"
    assert E % n_heads == 0
    Dh = E // n_heads

    # Kernel A: (B, Sq, E) lane-dense head-concat; no transposes needed anywhere.
    concat = _mha_attention(query_x, key_x, value_x,
                            prep["wq"], prep["bq"], prep["wk"], prep["bk"],
                            prep["wv"], prep["bv"],
                            n_heads=n_heads, head_dim=Dh,
                            scale=1.0 / math.sqrt(Dh))

    cat2d = concat.reshape(B * Sq, E)   # contiguous reshape (free)
    val2d = value_x.reshape(B * S, E)

    # Fused out-proj + residual + LN1 + FFN + residual + LN2 (dropouts = identity).
    out = _out_ffn_layernorm(cat2d, val2d, prep["wo"], prep["bo"],
                             prep["gamma1"], prep["beta1"],
                             prep["w1"], prep["b1"], prep["w2"], prep["b2"],
                             prep["gamma2"], prep["beta2"], eps)
    return out.reshape(B, Sq, E)


# ---------------------------------------------------------------------------
# Parameters (weights stored in (in, out) layout: y = x @ W + b)
# ---------------------------------------------------------------------------
def init_transformer_block_params(key, embed_dim, n_heads, expansion_factor):
    head_dim = embed_dim // n_heads
    hidden = expansion_factor * embed_dim
    ks = jax.random.split(key, 12)
    s = 0.05

    def w(k, shape):
        return jax.random.normal(k, shape, jnp.float32) * s

    return dict(
        wq=w(ks[0], (head_dim, head_dim)), bq=w(ks[1], (1, head_dim)),
        wk=w(ks[2], (head_dim, head_dim)), bk=w(ks[3], (1, head_dim)),
        wv=w(ks[4], (head_dim, head_dim)), bv=w(ks[5], (1, head_dim)),
        wo=w(ks[6], (embed_dim, embed_dim)), bo=w(ks[7], (1, embed_dim)),
        w1=w(ks[8], (embed_dim, hidden)), b1=w(ks[9], (1, hidden)),
        w2=w(ks[10], (hidden, embed_dim)), b2=w(ks[11], (1, embed_dim)),
        gamma1=jnp.ones((1, embed_dim), jnp.float32),
        beta1=jnp.zeros((1, embed_dim), jnp.float32),
        gamma2=jnp.ones((1, embed_dim), jnp.float32),
        beta2=jnp.zeros((1, embed_dim), jnp.float32),
    )


# ---------------------------------------------------------------------------
# Pure-JAX reference (same math as the PyTorch forward, eval mode, mask=None)
# ---------------------------------------------------------------------------
def _layernorm_ref(x, gamma, beta, eps):
    mean = jnp.mean(x, axis=-1, keepdims=True)
    var = jnp.mean((x - mean) ** 2, axis=-1, keepdims=True)
    return (x - mean) * jax.lax.rsqrt(var + eps) * gamma + beta


def transformer_block_reference(key_x, query_x, value_x, p, n_heads, eps=1e-5):
    hp = jax.lax.Precision.HIGHEST
    B, S, E = key_x.shape
    Sq = query_x.shape[1]
    Dh = E // n_heads

    kh = key_x.reshape(B, S, n_heads, Dh)
    qh = query_x.reshape(B, Sq, n_heads, Dh)
    vh = value_x.reshape(B, S, n_heads, Dh)

    k = jnp.einsum("bshd,de->bshe", kh, p["wk"], precision=hp) + p["bk"]
    q = jnp.einsum("bshd,de->bshe", qh, p["wq"], precision=hp) + p["bq"]
    v = jnp.einsum("bshd,de->bshe", vh, p["wv"], precision=hp) + p["bv"]

    k = k.transpose(0, 2, 1, 3)
    q = q.transpose(0, 2, 1, 3)
    v = v.transpose(0, 2, 1, 3)

    dot = jnp.einsum("bhqd,bhkd->bhqk", q, k, precision=hp) / math.sqrt(Dh)
    scores = jax.nn.softmax(dot, axis=-1)
    ctx = jnp.einsum("bhqk,bhkd->bhqd", scores, v, precision=hp)
    concat = ctx.transpose(0, 2, 1, 3).reshape(B, Sq, E)
    attn_out = jnp.einsum("bqe,ef->bqf", concat, p["wo"], precision=hp) + p["bo"]

    x = attn_out + value_x
    x = _layernorm_ref(x, p["gamma1"], p["beta1"], eps)
    h = jnp.maximum(jnp.einsum("bqe,ef->bqf", x, p["w1"], precision=hp) + p["b1"], 0.0)
    ff = jnp.einsum("bqf,fe->bqe", h, p["w2"], precision=hp) + p["b2"]
    x2 = ff + x
    return _layernorm_ref(x2, p["gamma2"], p["beta2"], eps)


if __name__ == "__main__":
    # Small but TPU-friendly shapes: embed_dim=128 keeps the last dim lane-dense.
    embed_dim = 128
    n_heads = 4
    expansion_factor = 4
    batch = 2
    seq = 8

    root = jax.random.PRNGKey(0)
    k_in, k_param = jax.random.split(root)
    kk, kq, kv = jax.random.split(k_in, 3)
    key_x = jax.random.normal(kk, (batch, seq, embed_dim), jnp.float32)
    query_x = jax.random.normal(kq, (batch, seq, embed_dim), jnp.float32)
    value_x = jax.random.normal(kv, (batch, seq, embed_dim), jnp.float32)

    params = init_transformer_block_params(k_param, embed_dim, n_heads, expansion_factor)
    prep = prepare_block_params(params, n_heads)   # one-time layout plumbing

    out = transformer_block_forward(key_x, query_x, value_x, prep, n_heads)
    out = jax.block_until_ready(out)

    ref = transformer_block_reference(key_x, query_x, value_x, params, n_heads)

    assert out.shape == (batch, seq, embed_dim)
    assert bool(jnp.all(jnp.isfinite(out)))
    max_diff = float(jnp.max(jnp.abs(out - ref)))
    # bf16 matmul operands vs. the f32 HIGHEST-precision reference -> loosened tol.
    assert jnp.allclose(out, ref, atol=2e-2, rtol=2e-2), f"max abs diff {max_diff}"

    print("KERNEL_OK")
</pallas_src>

<mosaic_0001>
module attributes {stable_mosaic.version = 11 : i64} {
  func.func @_attn_kernel(%arg0: i32, %arg1: memref<1x8x128xf32, #tpu.memory_space<vmem>>, %arg2: memref<1x8x128xf32, #tpu.memory_space<vmem>>, %arg3: memref<1x8x128xf32, #tpu.memory_space<vmem>>, %arg4: memref<128x128xbf16, #tpu.memory_space<vmem>>, %arg5: memref<1x128xf32, #tpu.memory_space<vmem>>, %arg6: memref<128x128xbf16, #tpu.memory_space<vmem>>, %arg7: memref<1x128xf32, #tpu.memory_space<vmem>>, %arg8: memref<128x128xbf16, #tpu.memory_space<vmem>>, %arg9: memref<1x128xf32, #tpu.memory_space<vmem>>, %arg10: memref<1x8x128xf32, #tpu.memory_space<vmem>>) attributes {dimension_semantics = [#tpu.dimension_semantics<parallel>], iteration_bounds = array<i64: 2>, scalar_prefetch = 0 : i64, scratch_operands = 0 : i64, tpu.core_type = #tpu.core_type<tc>, window_params = [{transform_indices = @transform_0, window_bounds = array<i64: 1, 8, 128>}, {transform_indices = @transform_1, window_bounds = array<i64: 1, 8, 128>}, {transform_indices = @transform_2, window_bounds = array<i64: 1, 8, 128>}, {pipeline_mode = #tpu.pipeline_mode<synchronous>, transform_indices = @transform_3, window_bounds = array<i64: 128, 128>}, {pipeline_mode = #tpu.pipeline_mode<synchronous>, transform_indices = @transform_4, window_bounds = array<i64: 1, 128>}, {pipeline_mode = #tpu.pipeline_mode<synchronous>, transform_indices = @transform_5, window_bounds = array<i64: 128, 128>}, {pipeline_mode = #tpu.pipeline_mode<synchronous>, transform_indices = @transform_6, window_bounds = array<i64: 1, 128>}, {pipeline_mode = #tpu.pipeline_mode<synchronous>, transform_indices = @transform_7, window_bounds = array<i64: 128, 128>}, {pipeline_mode = #tpu.pipeline_mode<synchronous>, transform_indices = @transform_8, window_bounds = array<i64: 1, 128>}, {transform_indices = @transform_9, window_bounds = array<i64: 1, 8, 128>}]} {
    %c0 = arith.constant 0 : index
    %c0_0 = arith.constant 0 : index
    %c0_1 = arith.constant 0 : index
    %0 = vector.load %arg1[%c0, %c0_0, %c0_1] : memref<1x8x128xf32, #tpu.memory_space<vmem>>, vector<1x8x128xf32>
    %1 = vector.shape_cast %0 : vector<1x8x128xf32> to vector<8x128xf32>
    %2 = arith.truncf %1 : vector<8x128xf32> to vector<8x128xbf16>
    %c0_2 = arith.constant 0 : index
    %c0_3 = arith.constant 0 : index
    %c0_4 = arith.constant 0 : index
    %3 = vector.load %arg2[%c0_2, %c0_3, %c0_4] : memref<1x8x128xf32, #tpu.memory_space<vmem>>, vector<1x8x128xf32>
    %4 = vector.shape_cast %3 : vector<1x8x128xf32> to vector<8x128xf32>
    %5 = arith.truncf %4 : vector<8x128xf32> to vector<8x128xbf16>
    %c0_5 = arith.constant 0 : index
    %c0_6 = arith.constant 0 : index
    %c0_7 = arith.constant 0 : index
    %6 = vector.load %arg3[%c0_5, %c0_6, %c0_7] : memref<1x8x128xf32, #tpu.memory_space<vmem>>, vector<1x8x128xf32>
    %7 = vector.shape_cast %6 : vector<1x8x128xf32> to vector<8x128xf32>
    %8 = arith.truncf %7 : vector<8x128xf32> to vector<8x128xbf16>
    %c0_8 = arith.constant 0 : index
    %c0_9 = arith.constant 0 : index
    %9 = vector.load %arg4[%c0_8, %c0_9] : memref<128x128xbf16, #tpu.memory_space<vmem>>, vector<128x128xbf16>
    %cst = arith.constant dense<0.000000e+00> : vector<8x128xf32>
    %10 = tpu.matmul %2, %9, %cst {dimension_numbers = #tpu.dot_dimension_numbers<[1], [0], [0], [1], [0, 0, 1, 1], [], []>} : vector<8x128xbf16>, vector<128x128xbf16>, vector<8x128xf32> -> vector<8x128xf32>
    %c0_10 = arith.constant 0 : index
    %c0_11 = arith.constant 0 : index
    %11 = vector.load %arg5[%c0_10, %c0_11] : memref<1x128xf32, #tpu.memory_space<vmem>>, vector<1x128xf32>
    %12 = vector.broadcast %11 : vector<1x128xf32> to vector<8x128xf32>
    %13 = arith.addf %10, %12 : vector<8x128xf32>
    %c0_12 = arith.constant 0 : index
    %c0_13 = arith.constant 0 : index
    %14 = vector.load %arg6[%c0_12, %c0_13] : memref<128x128xbf16, #tpu.memory_space<vmem>>, vector<128x128xbf16>
    %cst_14 = arith.constant dense<0.000000e+00> : vector<8x128xf32>
    %15 = tpu.matmul %5, %14, %cst_14 {dimension_numbers = #tpu.dot_dimension_numbers<[1], [0], [0], [1], [0, 0, 1, 1], [], []>} : vector<8x128xbf16>, vector<128x128xbf16>, vector<8x128xf32> -> vector<8x128xf32>
    %c0_15 = arith.constant 0 : index
    %c0_16 = arith.constant 0 : index
    %16 = vector.load %arg7[%c0_15, %c0_16] : memref<1x128xf32, #tpu.memory_space<vmem>>, vector<1x128xf32>
    %17 = vector.broadcast %16 : vector<1x128xf32> to vector<8x128xf32>
    %18 = arith.addf %15, %17 : vector<8x128xf32>
    %c0_17 = arith.constant 0 : index
    %c0_18 = arith.constant 0 : index
    %19 = vector.load %arg8[%c0_17, %c0_18] : memref<128x128xbf16, #tpu.memory_space<vmem>>, vector<128x128xbf16>
    %cst_19 = arith.constant dense<0.000000e+00> : vector<8x128xf32>
    %20 = tpu.matmul %8, %19, %cst_19 {dimension_numbers = #tpu.dot_dimension_numbers<[1], [0], [0], [1], [0, 0, 1, 1], [], []>} : vector<8x128xbf16>, vector<128x128xbf16>, vector<8x128xf32> -> vector<8x128xf32>
    %c0_20 = arith.constant 0 : index
    %c0_21 = arith.constant 0 : index
    %21 = vector.load %arg9[%c0_20, %c0_21] : memref<1x128xf32, #tpu.memory_space<vmem>>, vector<1x128xf32>
    %22 = vector.broadcast %21 : vector<1x128xf32> to vector<8x128xf32>
    %23 = arith.addf %20, %22 : vector<8x128xf32>
    %24 = vector.extract_strided_slice %13 {offsets = [0, 0], sizes = [8, 32], strides = [1, 1]} : vector<8x128xf32> to vector<8x32xf32>
    %25 = arith.truncf %24 : vector<8x32xf32> to vector<8x32xbf16>
    %26 = vector.extract_strided_slice %18 {offsets = [0, 0], sizes = [8, 32], strides = [1, 1]} : vector<8x128xf32> to vector<8x32xf32>
    %27 = arith.truncf %26 : vector<8x32xf32> to vector<8x32xbf16>
    %28 = vector.extract_strided_slice %23 {offsets = [0, 0], sizes = [8, 32], strides = [1, 1]} : vector<8x128xf32> to vector<8x32xf32>
    %29 = arith.truncf %28 : vector<8x32xf32> to vector<8x32xbf16>
    %cst_22 = arith.constant dense<0.000000e+00> : vector<8x8xf32>
    %30 = tpu.matmul %25, %27, %cst_22 {dimension_numbers = #tpu.dot_dimension_numbers<[1], [1], [0], [0], [0, 0, 1, 0], [], []>} : vector<8x32xbf16>, vector<8x32xbf16>, vector<8x8xf32> -> vector<8x8xf32>
    %cst_23 = arith.constant 0.176776692 : f32
    %31 = vector.broadcast %cst_23 : f32 to vector<8x8xf32>
    %32 = arith.mulf %30, %31 : vector<8x8xf32>
    %cst_24 = arith.constant dense<0xFF800000> : vector<8xf32>
    %33 = vector.multi_reduction <maximumf>, %32, %cst_24 [1] : vector<8x8xf32> to vector<8xf32>
    %34 = vector.shape_cast %33 : vector<8xf32> to vector<8x1xf32>
    %35 = vector.broadcast %34 : vector<8x1xf32> to vector<8x8xf32>
    %36 = arith.subf %32, %35 : vector<8x8xf32>
    %37 = math.exp %36 : vector<8x8xf32>
    %cst_25 = arith.constant dense<0.000000e+00> : vector<8xf32>
    %38 = vector.multi_reduction <add>, %37, %cst_25 [1] : vector<8x8xf32> to vector<8xf32>
    %39 = vector.shape_cast %38 : vector<8xf32> to vector<8x1xf32>
    %40 = tpu.reciprocal %39 {approx = true} : vector<8x1xf32> -> vector<8x1xf32>
    %41 = vector.broadcast %40 : vector<8x1xf32> to vector<8x8xf32>
    %42 = arith.mulf %37, %41 : vector<8x8xf32>
    %43 = arith.truncf %42 : vector<8x8xf32> to vector<8x8xbf16>
    %cst_26 = arith.constant dense<0.000000e+00> : vector<8x32xf32>
    %44 = tpu.matmul %43, %29, %cst_26 {dimension_numbers = #tpu.dot_dimension_numbers<[1], [0], [0], [1], [0, 0, 1, 1], [], []>} : vector<8x8xbf16>, vector<8x32xbf16>, vector<8x32xf32> -> vector<8x32xf32>
    %45 = vector.extract_strided_slice %13 {offsets = [0, 32], sizes = [8, 32], strides = [1, 1]} : vector<8x128xf32> to vector<8x32xf32>
    %46 = arith.truncf %45 : vector<8x32xf32> to vector<8x32xbf16>
    %47 = vector.extract_strided_slice %18 {offsets = [0, 32], sizes = [8, 32], strides = [1, 1]} : vector<8x128xf32> to vector<8x32xf32>
    %48 = arith.truncf %47 : vector<8x32xf32> to vector<8x32xbf16>
    %49 = vector.extract_strided_slice %23 {offsets = [0, 32], sizes = [8, 32], strides = [1, 1]} : vector<8x128xf32> to vector<8x32xf32>
    %50 = arith.truncf %49 : vector<8x32xf32> to vector<8x32xbf16>
    %cst_27 = arith.constant dense<0.000000e+00> : vector<8x8xf32>
    %51 = tpu.matmul %46, %48, %cst_27 {dimension_numbers = #tpu.dot_dimension_numbers<[1], [1], [0], [0], [0, 0, 1, 0], [], []>} : vector<8x32xbf16>, vector<8x32xbf16>, vector<8x8xf32> -> vector<8x8xf32>
    %cst_28 = arith.constant 0.176776692 : f32
    %52 = vector.broadcast %cst_28 : f32 to vector<8x8xf32>
    %53 = arith.mulf %51, %52 : vector<8x8xf32>
    %cst_29 = arith.constant dense<0xFF800000> : vector<8xf32>
    %54 = vector.multi_reduction <maximumf>, %53, %cst_29 [1] : vector<8x8xf32> to vector<8xf32>
    %55 = vector.shape_cast %54 : vector<8xf32> to vector<8x1xf32>
    %56 = vector.broadcast %55 : vector<8x1xf32> to vector<8x8xf32>
    %57 = arith.subf %53, %56 : vector<8x8xf32>
    %58 = math.exp %57 : vector<8x8xf32>
    %cst_30 = arith.constant dense<0.000000e+00> : vector<8xf32>
    %59 = vector.multi_reduction <add>, %58, %cst_30 [1] : vector<8x8xf32> to vector<8xf32>
    %60 = vector.shape_cast %59 : vector<8xf32> to vector<8x1xf32>
    %61 = tpu.reciprocal %60 {approx = true} : vector<8x1xf32> -> vector<8x1xf32>
    %62 = vector.broadcast %61 : vector<8x1xf32> to vector<8x8xf32>
    %63 = arith.mulf %58, %62 : vector<8x8xf32>
    %64 = arith.truncf %63 : vector<8x8xf32> to vector<8x8xbf16>
    %cst_31 = arith.constant dense<0.000000e+00> : vector<8x32xf32>
    %65 = tpu.matmul %64, %50, %cst_31 {dimension_numbers = #tpu.dot_dimension_numbers<[1], [0], [0], [1], [0, 0, 1, 1], [], []>} : vector<8x8xbf16>, vector<8x32xbf16>, vector<8x32xf32> -> vector<8x32xf32>
    %66 = vector.extract_strided_slice %13 {offsets = [0, 64], sizes = [8, 32], strides = [1, 1]} : vector<8x128xf32> to vector<8x32xf32>
    %67 = arith.truncf %66 : vector<8x32xf32> to vector<8x32xbf16>
    %68 = vector.extract_strided_slice %18 {offsets = [0, 64], sizes = [8, 32], strides = [1, 1]} : vector<8x128xf32> to vector<8x32xf32>
    %69 = arith.truncf %68 : vector<8x32xf32> to vector<8x32xbf16>
    %70 = vector.extract_strided_slice %23 {offsets = [0, 64], sizes = [8, 32], strides = [1, 1]} : vector<8x128xf32> to vector<8x32xf32>
    %71 = arith.truncf %70 : vector<8x32xf32> to vector<8x32xbf16>
    %cst_32 = arith.constant dense<0.000000e+00> : vector<8x8xf32>
    %72 = tpu.matmul %67, %69, %cst_32 {dimension_numbers = #tpu.dot_dimension_numbers<[1], [1], [0], [0], [0, 0, 1, 0], [], []>} : vector<8x32xbf16>, vector<8x32xbf16>, vector<8x8xf32> -> vector<8x8xf32>
    %cst_33 = arith.constant 0.176776692 : f32
    %73 = vector.broadcast %cst_33 : f32 to vector<8x8xf32>
    %74 = arith.mulf %72, %73 : vector<8x8xf32>
    %cst_34 = arith.constant dense<0xFF800000> : vector<8xf32>
    %75 = vector.multi_reduction <maximumf>, %74, %cst_34 [1] : vector<8x8xf32> to vector<8xf32>
    %76 = vector.shape_cast %75 : vector<8xf32> to vector<8x1xf32>
    %77 = vector.broadcast %76 : vector<8x1xf32> to vector<8x8xf32>
    %78 = arith.subf %74, %77 : vector<8x8xf32>
    %79 = math.exp %78 : vector<8x8xf32>
    %cst_35 = arith.constant dense<0.000000e+00> : vector<8xf32>
    %80 = vector.multi_reduction <add>, %79, %cst_35 [1] : vector<8x8xf32> to vector<8xf32>
    %81 = vector.shape_cast %80 : vector<8xf32> to vector<8x1xf32>
    %82 = tpu.reciprocal %81 {approx = true} : vector<8x1xf32> -> vector<8x1xf32>
    %83 = vector.broadcast %82 : vector<8x1xf32> to vector<8x8xf32>
    %84 = arith.mulf %79, %83 : vector<8x8xf32>
    %85 = arith.truncf %84 : vector<8x8xf32> to vector<8x8xbf16>
    %cst_36 = arith.constant dense<0.000000e+00> : vector<8x32xf32>
    %86 = tpu.matmul %85, %71, %cst_36 {dimension_numbers = #tpu.dot_dimension_numbers<[1], [0], [0], [1], [0, 0, 1, 1], [], []>} : vector<8x8xbf16>, vector<8x32xbf16>, vector<8x32xf32> -> vector<8x32xf32>
    %87 = vector.extract_strided_slice %13 {offsets = [0, 96], sizes = [8, 32], strides = [1, 1]} : vector<8x128xf32> to vector<8x32xf32>
    %88 = arith.truncf %87 : vector<8x32xf32> to vector<8x32xbf16>
    %89 = vector.extract_strided_slice %18 {offsets = [0, 96], sizes = [8, 32], strides = [1, 1]} : vector<8x128xf32> to vector<8x32xf32>
    %90 = arith.truncf %89 : vector<8x32xf32> to vector<8x32xbf16>
    %91 = vector.extract_strided_slice %23 {offsets = [0, 96], sizes = [8, 32], strides = [1, 1]} : vector<8x128xf32> to vector<8x32xf32>
    %92 = arith.truncf %91 : vector<8x32xf32> to vector<8x32xbf16>
    %cst_37 = arith.constant dense<0.000000e+00> : vector<8x8xf32>
    %93 = tpu.matmul %88, %90, %cst_37 {dimension_numbers = #tpu.dot_dimension_numbers<[1], [1], [0], [0], [0, 0, 1, 0], [], []>} : vector<8x32xbf16>, vector<8x32xbf16>, vector<8x8xf32> -> vector<8x8xf32>
    %cst_38 = arith.constant 0.176776692 : f32
    %94 = vector.broadcast %cst_38 : f32 to vector<8x8xf32>
    %95 = arith.mulf %93, %94 : vector<8x8xf32>
    %cst_39 = arith.constant dense<0xFF800000> : vector<8xf32>
    %96 = vector.multi_reduction <maximumf>, %95, %cst_39 [1] : vector<8x8xf32> to vector<8xf32>
    %97 = vector.shape_cast %96 : vector<8xf32> to vector<8x1xf32>
    %98 = vector.broadcast %97 : vector<8x1xf32> to vector<8x8xf32>
    %99 = arith.subf %95, %98 : vector<8x8xf32>
    %100 = math.exp %99 : vector<8x8xf32>
    %cst_40 = arith.constant dense<0.000000e+00> : vector<8xf32>
    %101 = vector.multi_reduction <add>, %100, %cst_40 [1] : vector<8x8xf32> to vector<8xf32>
    %102 = vector.shape_cast %101 : vector<8xf32> to vector<8x1xf32>
    %103 = tpu.reciprocal %102 {approx = true} : vector<8x1xf32> -> vector<8x1xf32>
    %104 = vector.broadcast %103 : vector<8x1xf32> to vector<8x8xf32>
    %105 = arith.mulf %100, %104 : vector<8x8xf32>
    %106 = arith.truncf %105 : vector<8x8xf32> to vector<8x8xbf16>
    %cst_41 = arith.constant dense<0.000000e+00> : vector<8x32xf32>
    %107 = tpu.matmul %106, %92, %cst_41 {dimension_numbers = #tpu.dot_dimension_numbers<[1], [0], [0], [1], [0, 0, 1, 1], [], []>} : vector<8x8xbf16>, vector<8x32xbf16>, vector<8x32xf32> -> vector<8x32xf32>
    %108 = tpu.concatenate %44, %65, %86, %107 in 1 : vector<8x32xf32>, vector<8x32xf32>, vector<8x32xf32>, vector<8x32xf32> -> vector<8x128xf32>
    %c0_42 = arith.constant 0 : index
    %c0_43 = arith.constant 0 : index
    %c0_44 = arith.constant 0 : index
    %109 = vector.load %arg10[%c0_42, %c0_43, %c0_44] : memref<1x8x128xf32, #tpu.memory_space<vmem>>, vector<1x8x128xf32>
    %110 = vector.shape_cast %109 : vector<1x8x128xf32> to vector<8x128xf32>
    %111 = vector.shape_cast %108 : vector<8x128xf32> to vector<1x8x128xf32>
    tpu.vector_store %arg10[%c0_42, %c0_43, %c0_44], %111 {strides = array<i32>} : memref<1x8x128xf32, #tpu.memory_space<vmem>>, vector<1x8x128xf32>,
    return
  }
  func.func @transform_0(%arg0: i32) -> (i32, i32, i32) {
    %c0_i32 = arith.constant 0 : i32
    %c0_i32_0 = arith.constant 0 : i32
    %c0_i32_1 = arith.constant 0 : i32
    return %arg0, %c0_i32, %c0_i32_0 : i32, i32, i32
  }
  func.func @transform_1(%arg0: i32) -> (i32, i32, i32) {
    %c0_i32 = arith.constant 0 : i32
    %c0_i32_0 = arith.constant 0 : i32
    %c0_i32_1 = arith.constant 0 : i32
    return %arg0, %c0_i32, %c0_i32_0 : i32, i32, i32
  }
  func.func @transform_2(%arg0: i32) -> (i32, i32, i32) {
    %c0_i32 = arith.constant 0 : i32
    %c0_i32_0 = arith.constant 0 : i32
    %c0_i32_1 = arith.constant 0 : i32
    return %arg0, %c0_i32, %c0_i32_0 : i32, i32, i32
  }
  func.func @transform_3(%arg0: i32) -> (i32, i32) {
    %c0_i32 = arith.constant 0 : i32
    %c0_i32_0 = arith.constant 0 : i32
    %c0_i32_1 = arith.constant 0 : i32
    return %c0_i32, %c0_i32_0 : i32, i32
  }
  func.func @transform_4(%arg0: i32) -> (i32, i32) {
    %c0_i32 = arith.constant 0 : i32
    %c0_i32_0 = arith.constant 0 : i32
    %c0_i32_1 = arith.constant 0 : i32
    return %c0_i32, %c0_i32_0 : i32, i32
  }
  func.func @transform_5(%arg0: i32) -> (i32, i32) {
    %c0_i32 = arith.constant 0 : i32
    %c0_i32_0 = arith.constant 0 : i32
    %c0_i32_1 = arith.constant 0 : i32
    return %c0_i32, %c0_i32_0 : i32, i32
  }
  func.func @transform_6(%arg0: i32) -> (i32, i32) {
    %c0_i32 = arith.constant 0 : i32
    %c0_i32_0 = arith.constant 0 : i32
    %c0_i32_1 = arith.constant 0 : i32
    return %c0_i32, %c0_i32_0 : i32, i32
  }
  func.func @transform_7(%arg0: i32) -> (i32, i32) {
    %c0_i32 = arith.constant 0 : i32
    %c0_i32_0 = arith.constant 0 : i32
    %c0_i32_1 = arith.constant 0 : i32
    return %c0_i32, %c0_i32_0 : i32, i32
  }
  func.func @transform_8(%arg0: i32) -> (i32, i32) {
    %c0_i32 = arith.constant 0 : i32
    %c0_i32_0 = arith.constant 0 : i32
    %c0_i32_1 = arith.constant 0 : i32
    return %c0_i32, %c0_i32_0 : i32, i32
  }
  func.func @transform_9(%arg0: i32) -> (i32, i32, i32) {
    %c0_i32 = arith.constant 0 : i32
    %c0_i32_0 = arith.constant 0 : i32
    %c0_i32_1 = arith.constant 0 : i32
    return %arg0, %c0_i32, %c0_i32_0 : i32, i32, i32
  }
}

</mosaic_0001>

<llo_original>
// kernel: tpu_custom_call.1
$region0: #{tpu_custom_call.1}
  #allocation0 [shape = 'u32[]', space=smem, size = 0x4, offset = 0x4, fixed_abs, tag = 'smem constant byte address 0x4 - core index']
  #allocation1 [shape = 'u32[144,128]{1,0:T(1,128)}', space=vmem, size = 0x12000, scoped, tag = 'internal scratch']
  %s0 = inlined_call_operand.hbm [shape: f32[2,8,128], index: 0, kind: input, shape index: {}]
  %s1 = inlined_call_operand.hbm [shape: f32[2,8,128], index: 1, kind: input, shape index: {}]
  %s2 = inlined_call_operand.hbm [shape: f32[2,8,128], index: 2, kind: input, shape index: {}]
  %s3 = inlined_call_operand.hbm [shape: bf16[128,128], index: 3, kind: input, shape index: {}]
  %s4 = inlined_call_operand.vmem [shape: f32[1,128], index: 4, kind: input, shape index: {}]
  %s5 = inlined_call_operand.hbm [shape: bf16[128,128], index: 5, kind: input, shape index: {}]
  %s6 = inlined_call_operand.vmem [shape: f32[1,128], index: 6, kind: input, shape index: {}]
  %s7 = inlined_call_operand.hbm [shape: bf16[128,128], index: 7, kind: input, shape index: {}]
  %s8 = inlined_call_operand.vmem [shape: f32[1,128], index: 8, kind: input, shape index: {}]
  %s9 = inlined_call_operand.hbm [shape: f32[2,8,128], index: 9, kind: output, shape index: {}]
  %s10 = sld [smem:[#allocation0]]
  $region93: #{tpu_custom_call.1} parent=0
    _
  %s12 = ssub.s32 1, %s10
  %s13 = scalar_select 0, %s12, %s10
  $region1: #{tpu_custom_call.1} parent=0
    #allocation2 [shape = 'u8[8192]{0}', space=vmem, size = 0x2000, scoped, tag = 'input window, operand 0']
    #allocation3 [shape = 's32[2]{0}', space=sflag, size = 0x8, scoped, tag = 'scoped memory for tpu_custom_call.1']
    #allocation4 [shape = 's32[2]{0}', space=sflag, size = 0x8, scoped, tag = 'scoped memory for tpu_custom_call.1']
    #allocation5 [shape = 'u8[8192]{0}', space=vmem, size = 0x2000, scoped, tag = 'input window, operand 1']
    #allocation6 [shape = 's32[2]{0}', space=sflag, size = 0x8, scoped, tag = 'scoped memory for tpu_custom_call.1']
    #allocation7 [shape = 'u8[8192]{0}', space=vmem, size = 0x2000, scoped, tag = 'input window, operand 2']
    #allocation8 [shape = 'u8[32768]{0}', space=vmem, size = 0x8000, scoped, tag = 'input window, operand 3, single buffered']
    #allocation9 [shape = 's32[1]{0}', space=sflag, size = 0x4, scoped, tag = 'scoped memory for tpu_custom_call.1']
    #allocation10 [shape = 'u8[32768]{0}', space=vmem, size = 0x8000, scoped, tag = 'input window, operand 5, single buffered']
    #allocation11 [shape = 'u8[32768]{0}', space=vmem, size = 0x8000, scoped, tag = 'input window, operand 7, single buffered']
    #allocation12 [shape = 's32[1]{0}', space=sflag, size = 0x4, scoped, tag = 'scoped memory for tpu_custom_call.1']
    #allocation13 [shape = 'u8[8192]{0}', space=vmem, size = 0x2000, scoped, tag = 'output window, operand 0']
    %14 = vsyncpa [#allocation3], 0
    %s15 = scalar_lea.sflag [#allocation3], 1
    %16 = vsyncpa %s15, 0
    %17 = vsyncpa [#allocation6], 0
    %s18 = scalar_lea.sflag [#allocation6], 1
    %19 = vsyncpa %s18, 0
    %20 = vsyncpa [#allocation9], 0
    %21 = vsyncpa [#allocation12], 0
    %22 = vsyncpa [#allocation4], 0
    %s23 = scalar_lea.sflag [#allocation4], 1
    %24 = vsyncpa %s23, 0
    loop: start=0, step=1, limit=4
    $region2: #{tpu_custom_call.1} parent=1 // loop_pre_header
      _
    $region3: #{tpu_custom_call.1} parent=1 // loop_header
      %s26 = sphi 0, %s30
      %p27 = scmp.ge.s32.totalorder %s26, 4
      %s36 = sphi 0, %s38
      %s39 = sphi 0, %s36
      %s40 = sphi 0, %s39
      %s56 = sphi 0, %s40
      %s62 = sphi 0, %s64
      %s65 = sphi 0, %s62
      %s66 = sphi 0, %s65
      %s82 = sphi 0, %s66
      %s88 = sphi 0, %s90
      %s91 = sphi 0, %s88
      %s92 = sphi 0, %s91
      %s108 = sphi 0, %s92
      %s112 = sphi 0, %s112
      %s114 = sphi 0, %s112
      %s115 = sphi 0, %s114
      %s129 = sphi 0, %s115
      %s133 = sphi 0, %s133
      %s135 = sphi 0, %s133
      %s136 = sphi 0, %s135
      %s150 = sphi 0, %s136
      %s154 = sphi 0, %s154
      %s156 = sphi 0, %s154
      %s157 = sphi 0, %s156
      %s171 = sphi 0, %s157
      %s175 = sphi 0, %s175
      %s177 = sphi 0, %s175
      %s178 = sphi 0, %s177
      %s192 = sphi 0, %s178
      %s196 = sphi 0, %s196
      %s198 = sphi 0, %s196
      %s199 = sphi 0, %s198
      %s213 = sphi 0, %s199
      %s217 = sphi 0, %s217
      %s219 = sphi 0, %s217
      %s220 = sphi 0, %s219
      %s234 = sphi 0, %s220
      %s240 = sphi 0, %s242
      %s243 = sphi 0, %s240
      %s244 = sphi 0, %s243
      %s260 = sphi 0, %s244
    $region4: #{tpu_custom_call.1} parent=1 // loop_header_branch
      %29 = sbr.rel (%p27) target = $region8
    $region5: #{tpu_custom_call.1} parent=1 // loop_body
      %s31 = ssub.s32 %s26, 1
      %s32 = ssub.s32 %s26, 2
      %s33 = sadd.s32 %s26, 1
      %s34 = ssub.s32 %s26, %s33
      %p35 = scmp.eq.s32.totalorder %s34, 0
      %s37 = sadd.s32 %s36, 1
      %s38 = scalar_select %p35, %s36, %s37
      %p41 = pneg %p35
      %p42 = scmp.eq.s32.totalorder %s26, 1
      %p43 = por %p41, %p42
      %p44 = scmp.ne.s32.totalorder %s36, %s39
      %p45 = scmp.eq.s32.totalorder %s26, 0
      %p46 = por %p44, %p45
      %p47 = scmp.ne.s32.totalorder %s36, %s39
      %p48 = scmp.eq.s32.totalorder %s31, 1
      %p49 = por %p47, %p48
      %p50 = scmp.ne.s32.totalorder %s39, %s40
      %p51 = scmp.eq.s32.totalorder %s31, 0
      %p52 = por %p50, %p51
      %p53 = scmp.ne.s32.totalorder %s39, %s40
      %p54 = scmp.eq.s32.totalorder %s32, 1
      %p55 = por %p53, %p54
      %p57 = scmp.ne.s32.totalorder %s40, %s56
      %p58 = scmp.eq.s32.totalorder %s32, 0
      %p59 = por %p57, %p58
      %s60 = ssub.s32 %s26, %s33
      %p61 = scmp.eq.s32.totalorder %s60, 0
      %s63 = sadd.s32 %s62, 1
      %s64 = scalar_select %p61, %s62, %s63
      %p67 = pneg %p61
      %p68 = scmp.eq.s32.totalorder %s26, 1
      %p69 = por %p67, %p68
      %p70 = scmp.ne.s32.totalorder %s62, %s65
      %p71 = scmp.eq.s32.totalorder %s26, 0
      %p72 = por %p70, %p71
      %p73 = scmp.ne.s32.totalorder %s62, %s65
      %p74 = scmp.eq.s32.totalorder %s31, 1
      %p75 = por %p73, %p74
      %p76 = scmp.ne.s32.totalorder %s65, %s66
      %p77 = scmp.eq.s32.totalorder %s31, 0
      %p78 = por %p76, %p77
      %p79 = scmp.ne.s32.totalorder %s65, %s66
      %p80 = scmp.eq.s32.totalorder %s32, 1
      %p81 = por %p79, %p80
      %p83 = scmp.ne.s32.totalorder %s66, %s82
      %p84 = scmp.eq.s32.totalorder %s32, 0
      %p85 = por %p83, %p84
      %s86 = ssub.s32 %s26, %s33
      %p87 = scmp.eq.s32.totalorder %s86, 0
      %s89 = sadd.s32 %s88, 1
      %s90 = scalar_select %p87, %s88, %s89
      %p93 = pneg %p87
      %p94 = scmp.eq.s32.totalorder %s26, 1
      %p95 = por %p93, %p94
      %p96 = scmp.ne.s32.totalorder %s88, %s91
      %p97 = scmp.eq.s32.totalorder %s26, 0
      %p98 = por %p96, %p97
      %p99 = scmp.ne.s32.totalorder %s88, %s91
      %p100 = scmp.eq.s32.totalorder %s31, 1
      %p101 = por %p99, %p100
      %p102 = scmp.ne.s32.totalorder %s91, %s92
      %p103 = scmp.eq.s32.totalorder %s31, 0
      %p104 = por %p102, %p103
      %p105 = scmp.ne.s32.totalorder %s91, %s92
      %p106 = scmp.eq.s32.totalorder %s32, 1
      %p107 = por %p105, %p106
      %p109 = scmp.ne.s32.totalorder %s92, %s108
      %p110 = scmp.eq.s32.totalorder %s32, 0
      %p111 = por %p109, %p110
      %s113 = sadd.s32 %s112, 1
      %p116 = scmp.eq.s32.totalorder %s26, 1
      %p117 = scmp.ne.s32.totalorder %s112, %s114
      %p118 = scmp.eq.s32.totalorder %s26, 0
      %p119 = por %p117, %p118
      %p120 = scmp.ne.s32.totalorder %s112, %s114
      %p121 = scmp.eq.s32.totalorder %s31, 1
      %p122 = por %p120, %p121
      %p123 = scmp.ne.s32.totalorder %s114, %s115
      %p124 = scmp.eq.s32.totalorder %s31, 0
      %p125 = por %p123, %p124
      %p126 = scmp.ne.s32.totalorder %s114, %s115
      %p127 = scmp.eq.s32.totalorder %s32, 1
      %p128 = por %p126, %p127
      %p130 = scmp.ne.s32.totalorder %s115, %s129
      %p131 = scmp.eq.s32.totalorder %s32, 0
      %p132 = por %p130, %p131
      %s134 = sadd.s32 %s133, 1
      %p137 = scmp.eq.s32.totalorder %s26, 1
      %p138 = scmp.ne.s32.totalorder %s133, %s135
      %p139 = scmp.eq.s32.totalorder %s26, 0
      %p140 = por %p138, %p139
      %p141 = scmp.ne.s32.totalorder %s133, %s135
      %p142 = scmp.eq.s32.totalorder %s31, 1
      %p143 = por %p141, %p142
      %p144 = scmp.ne.s32.totalorder %s135, %s136
      %p145 = scmp.eq.s32.totalorder %s31, 0
      %p146 = por %p144, %p145
      %p147 = scmp.ne.s32.totalorder %s135, %s136
      %p148 = scmp.eq.s32.totalorder %s32, 1
      %p149 = por %p147, %p148
      %p151 = scmp.ne.s32.totalorder %s136, %s150
      %p152 = scmp.eq.s32.totalorder %s32, 0
      %p153 = por %p151, %p152
      %s155 = sadd.s32 %s154, 1
      %p158 = scmp.eq.s32.totalorder %s26, 1
      %p159 = scmp.ne.s32.totalorder %s154, %s156
      %p160 = scmp.eq.s32.totalorder %s26, 0
      %p161 = por %p159, %p160
      %p162 = scmp.ne.s32.totalorder %s154, %s156
      %p163 = scmp.eq.s32.totalorder %s31, 1
      %p164 = por %p162, %p163
      %p165 = scmp.ne.s32.totalorder %s156, %s157
      %p166 = scmp.eq.s32.totalorder %s31, 0
      %p167 = por %p165, %p166
      %p168 = scmp.ne.s32.totalorder %s156, %s157
      %p169 = scmp.eq.s32.totalorder %s32, 1
      %p170 = por %p168, %p169
      %p172 = scmp.ne.s32.totalorder %s157, %s171
      %p173 = scmp.eq.s32.totalorder %s32, 0
      %p174 = por %p172, %p173
      %s176 = sadd.s32 %s175, 1
      %p179 = scmp.eq.s32.totalorder %s26, 1
      %p180 = scmp.ne.s32.totalorder %s175, %s177
      %p181 = scmp.eq.s32.totalorder %s26, 0
      %p182 = por %p180, %p181
      %p183 = scmp.ne.s32.totalorder %s175, %s177
      %p184 = scmp.eq.s32.totalorder %s31, 1
      %p185 = por %p183, %p184
      %p186 = scmp.ne.s32.totalorder %s177, %s178
      %p187 = scmp.eq.s32.totalorder %s31, 0
      %p188 = por %p186, %p187
      %p189 = scmp.ne.s32.totalorder %s177, %s178
      %p190 = scmp.eq.s32.totalorder %s32, 1
      %p191 = por %p189, %p190
      %p193 = scmp.ne.s32.totalorder %s178, %s192
      %p194 = scmp.eq.s32.totalorder %s32, 0
      %p195 = por %p193, %p194
      %s197 = sadd.s32 %s196, 1
      %p200 = scmp.eq.s32.totalorder %s26, 1
      %p201 = scmp.ne.s32.totalorder %s196, %s198
      %p202 = scmp.eq.s32.totalorder %s26, 0
      %p203 = por %p201, %p202
      %p204 = scmp.ne.s32.totalorder %s196, %s198
      %p205 = scmp.eq.s32.totalorder %s31, 1
      %p206 = por %p204, %p205
      %p207 = scmp.ne.s32.totalorder %s198, %s199
      %p208 = scmp.eq.s32.totalorder %s31, 0
      %p209 = por %p207, %p208
      %p210 = scmp.ne.s32.totalorder %s198, %s199
      %p211 = scmp.eq.s32.totalorder %s32, 1
      %p212 = por %p210, %p211
      %p214 = scmp.ne.s32.totalorder %s199, %s213
      %p215 = scmp.eq.s32.totalorder %s32, 0
      %p216 = por %p214, %p215
      %s218 = sadd.s32 %s217, 1
      %p221 = scmp.eq.s32.totalorder %s26, 1
      %p222 = scmp.ne.s32.totalorder %s217, %s219
      %p223 = scmp.eq.s32.totalorder %s26, 0
      %p224 = por %p222, %p223
      %p225 = scmp.ne.s32.totalorder %s217, %s219
      %p226 = scmp.eq.s32.totalorder %s31, 1
      %p227 = por %p225, %p226
      %p228 = scmp.ne.s32.totalorder %s219, %s220
      %p229 = scmp.eq.s32.totalorder %s31, 0
      %p230 = por %p228, %p229
      %p231 = scmp.ne.s32.totalorder %s219, %s220
      %p232 = scmp.eq.s32.totalorder %s32, 1
      %p233 = por %p231, %p232
      %p235 = scmp.ne.s32.totalorder %s220, %s234
      %p236 = scmp.eq.s32.totalorder %s32, 0
      %p237 = por %p235, %p236
      %s238 = ssub.s32 %s26, %s33
      %p239 = scmp.eq.s32.totalorder %s238, 0
      %s241 = sadd.s32 %s240, 1
      %s242 = scalar_select %p239, %s240, %s241
      %p245 = pneg %p239
      %p246 = scmp.eq.s32.totalorder %s26, 1
      %p247 = por %p245, %p246
      %p248 = scmp.ne.s32.totalorder %s240, %s243
      %p249 = scmp.eq.s32.totalorder %s26, 0
      %p250 = por %p248, %p249
      %p251 = scmp.ne.s32.totalorder %s240, %s243
      %p252 = scmp.eq.s32.totalorder %s31, 1
      %p253 = por %p251, %p252
      %p254 = scmp.ne.s32.totalorder %s243, %s244
      %p255 = scmp.eq.s32.totalorder %s31, 0
      %p256 = por %p254, %p255
      %p257 = scmp.ne.s32.totalorder %s243, %s244
      %p258 = scmp.eq.s32.totalorder %s32, 1
      %p259 = por %p257, %p258
      %p261 = scmp.ne.s32.totalorder %s244, %s260
      %p262 = scmp.eq.s32.totalorder %s32, 0
      %p263 = por %p261, %p262
      %p264 = scmp.le.s32.totalorder 1, %s26
      %p265 = scmp.lt.s32.totalorder %s26, 3
      %p266 = pnand %p264, %p265
      %p267 = pneg %p266
      // Predicated region
      $region9: #{tpu_custom_call.1} parent=5 // pred_check
        _
      $region10: #{tpu_custom_call.1} parent=5 // pred_check_branch
        %269 = sbr.rel (%p266) target = $region12
      $region11: #{tpu_custom_call.1} parent=5 // pred_region
        %s270 = ssub.s32 %s26, 1
        // Predicated region
        $region13: #{tpu_custom_call.1} parent=11 // pred_check
          %p271 = pneg %p125
        $region14: #{tpu_custom_call.1} parent=11 // pred_check_branch
          %273 = sbr.rel (%p271) target = $region16
        $region15: #{tpu_custom_call.1} parent=11 // pred_region
          %s275 = ssub.s32 1024, 1024
          %276 = vsyncadd [#allocation9], %s275
          %s277 = sshll.u32 [#allocation8], 4
          %s278 = int_to_ptr.vmem [resolvable:$true] %s277
          %283 = dma.hbm_to_vmem [thread:$0]  %s3, 1024, %s278, [#allocation9], 64, 64, 4
        $region16: #{tpu_custom_call.1} parent=11 // pred_fallthru
          _
        // Predicated region
        $region17: #{tpu_custom_call.1} parent=11 // pred_check
          %p284 = pneg %p146
        $region18: #{tpu_custom_call.1} parent=11 // pred_check_branch
          %286 = sbr.rel (%p284) target = $region20
        $region19: #{tpu_custom_call.1} parent=11 // pred_region
          _
        $region20: #{tpu_custom_call.1} parent=11 // pred_fallthru
          _
        // Predicated region
        $region21: #{tpu_custom_call.1} parent=11 // pred_check
          %p287 = pneg %p167
        $region22: #{tpu_custom_call.1} parent=11 // pred_check_branch
          %289 = sbr.rel (%p287) target = $region24
        $region23: #{tpu_custom_call.1} parent=11 // pred_region
          %s291 = ssub.s32 1024, 1024
          %292 = vsyncadd [#allocation9], %s291
          %s293 = sshll.u32 [#allocation10], 4
          %s294 = int_to_ptr.vmem [resolvable:$true] %s293
          %299 = dma.hbm_to_vmem [thread:$0]  %s5, 1024, %s294, [#allocation9], 64, 64, 4
        $region24: #{tpu_custom_call.1} parent=11 // pred_fallthru
          _
        // Predicated region
        $region25: #{tpu_custom_call.1} parent=11 // pred_check
          %p300 = pneg %p188
        $region26: #{tpu_custom_call.1} parent=11 // pred_check_branch
          %302 = sbr.rel (%p300) target = $region28
        $region27: #{tpu_custom_call.1} parent=11 // pred_region
          _
        $region28: #{tpu_custom_call.1} parent=11 // pred_fallthru
          _
        // Predicated region
        $region29: #{tpu_custom_call.1} parent=11 // pred_check
          %p303 = pneg %p209
        $region30: #{tpu_custom_call.1} parent=11 // pred_check_branch
          %305 = sbr.rel (%p303) target = $region32
        $region31: #{tpu_custom_call.1} parent=11 // pred_region
          %s307 = ssub.s32 1024, 1024
          %308 = vsyncadd [#allocation12], %s307
          %s309 = sshll.u32 [#allocation11], 4
          %s310 = int_to_ptr.vmem [resolvable:$true] %s309
          %315 = dma.hbm_to_vmem [thread:$0]  %s7, 1024, %s310, [#allocation12], 64, 64, 4
        $region32: #{tpu_custom_call.1} parent=11 // pred_fallthru
          _
        // Predicated region
        $region33: #{tpu_custom_call.1} parent=11 // pred_check
          %p316 = pneg %p230
        $region34: #{tpu_custom_call.1} parent=11 // pred_check_branch
          %318 = sbr.rel (%p316) target = $region36
        $region35: #{tpu_custom_call.1} parent=11 // pred_region
          _
        $region36: #{tpu_custom_call.1} parent=11 // pred_fallthru
          _
      $region12: #{tpu_custom_call.1} parent=5 // pred_fallthru
        _
      %p319 = scmp.lt.s32.totalorder %s26, 2
      // Predicated region
      $region37: #{tpu_custom_call.1} parent=5 // pred_check
        %p320 = pneg %p319
      $region38: #{tpu_custom_call.1} parent=5 // pred_check_branch
        %322 = sbr.rel (%p320) target = $region40
      $region39: #{tpu_custom_call.1} parent=5 // pred_region
        // Predicated region
        $region41: #{tpu_custom_call.1} parent=39 // pred_check
          %p323 = pneg %p46
        $region42: #{tpu_custom_call.1} parent=39 // pred_check_branch
          %325 = sbr.rel (%p323) target = $region44
        $region43: #{tpu_custom_call.1} parent=39 // pred_region
          %s326 = sand.u32 %s36, 1
          %s327 = scalar_lea.sflag [#allocation3], %s326
          %s328 = sand.u32 %s36, 1
          %s329 = smul.addr %s328, 8
          %s330 = scalar_lea.vmem [#allocation2], %s329
          %s332 = ssub.s32 128, 128
          %333 = vsyncadd %s327, %s332
          %s334 = smul.addr %s26, 128
          %s335 = scalar_lea.hbm %s0, %s334
          %s337 = sshll.u32 %s330, 4
          %s338 = int_to_ptr.vmem [resolvable:$true] %s337
          %340 = dma.hbm_to_vmem [thread:$0]  %s335, 128, %s338, %s327
        $region44: #{tpu_custom_call.1} parent=39 // pred_fallthru
          _
        // Predicated region
        $region45: #{tpu_custom_call.1} parent=39 // pred_check
          %p341 = pneg %p72
        $region46: #{tpu_custom_call.1} parent=39 // pred_check_branch
          %343 = sbr.rel (%p341) target = $region48
        $region47: #{tpu_custom_call.1} parent=39 // pred_region
          %s344 = sand.u32 %s26, 1
          %s345 = scalar_lea.sflag [#allocation6], %s344
          %s346 = sand.u32 %s62, 1
          %s347 = smul.addr %s346, 8
          %s348 = scalar_lea.vmem [#allocation5], %s347
          %s350 = ssub.s32 128, 128
          %351 = vsyncadd %s345, %s350
          %s352 = smul.addr %s26, 128
          %s353 = scalar_lea.hbm %s1, %s352
          %s355 = sshll.u32 %s348, 4
          %s356 = int_to_ptr.vmem [resolvable:$true] %s355
          %358 = dma.hbm_to_vmem [thread:$0]  %s353, 128, %s356, %s345
        $region48: #{tpu_custom_call.1} parent=39 // pred_fallthru
          _
        // Predicated region
        $region49: #{tpu_custom_call.1} parent=39 // pred_check
          %p359 = pneg %p98
        $region50: #{tpu_custom_call.1} parent=39 // pred_check_branch
          %361 = sbr.rel (%p359) target = $region52
        $region51: #{tpu_custom_call.1} parent=39 // pred_region
          %s362 = sand.u32 %s26, 1
          %s363 = scalar_lea.sflag [#allocation6], %s362
          %s364 = sand.u32 %s88, 1
          %s365 = smul.addr %s364, 8
          %s366 = scalar_lea.vmem [#allocation7], %s365
          %s368 = ssub.s32 128, 128
          %369 = vsyncadd %s363, %s368
          %s370 = smul.addr %s26, 128
          %s371 = scalar_lea.hbm %s2, %s370
          %s373 = sshll.u32 %s366, 4
          %s374 = int_to_ptr.vmem [resolvable:$true] %s373
          %376 = dma.hbm_to_vmem [thread:$0]  %s371, 128, %s374, %s363
        $region52: #{tpu_custom_call.1} parent=39 // pred_fallthru
          _
      $region40: #{tpu_custom_call.1} parent=5 // pred_fallthru
        _
      %p377 = scmp.le.s32.totalorder 1, %s26
      %p378 = scmp.lt.s32.totalorder %s26, 3
      %p379 = pnand %p377, %p378
      %p380 = pneg %p379
      // Predicated region
      $region53: #{tpu_custom_call.1} parent=5 // pred_check
        _
      $region54: #{tpu_custom_call.1} parent=5 // pred_check_branch
        %382 = sbr.rel (%p379) target = $region56
      $region55: #{tpu_custom_call.1} parent=5 // pred_region
        %s383 = ssub.s32 %s26, 1
        %s384 = sand.u32 %s39, 1
        %s385 = scalar_lea.sflag [#allocation3], %s384
        %s386 = sand.u32 %s39, 1
        %s387 = smul.addr %s386, 8
        %s388 = scalar_lea.vmem [#allocation2], %s387
        // Predicated region
        $region57: #{tpu_custom_call.1} parent=55 // pred_check
          %p389 = pneg %p52
        $region58: #{tpu_custom_call.1} parent=55 // pred_check_branch
          %391 = sbr.rel (%p389) target = $region60
        $region59: #{tpu_custom_call.1} parent=55 // pred_region
          %392 = dma.done %s385, 128
        $region60: #{tpu_custom_call.1} parent=55 // pred_fallthru
          _
        %s393 = sand.u32 %s31, 1
        %s394 = scalar_lea.sflag [#allocation6], %s393
        %s395 = sand.u32 %s65, 1
        %s396 = smul.addr %s395, 8
        %s397 = scalar_lea.vmem [#allocation5], %s396
        // Predicated region
        $region61: #{tpu_custom_call.1} parent=55 // pred_check
          %p398 = pneg %p78
        $region62: #{tpu_custom_call.1} parent=55 // pred_check_branch
          %400 = sbr.rel (%p398) target = $region64
        $region63: #{tpu_custom_call.1} parent=55 // pred_region
          %401 = dma.done %s394, 128
        $region64: #{tpu_custom_call.1} parent=55 // pred_fallthru
          _
        %s402 = sand.u32 %s31, 1
        %s403 = scalar_lea.sflag [#allocation6], %s402
        %s404 = sand.u32 %s91, 1
        %s405 = smul.addr %s404, 8
        %s406 = scalar_lea.vmem [#allocation7], %s405
        // Predicated region
        $region65: #{tpu_custom_call.1} parent=55 // pred_check
          %p407 = pneg %p104
        $region66: #{tpu_custom_call.1} parent=55 // pred_check_branch
          %409 = sbr.rel (%p407) target = $region68
        $region67: #{tpu_custom_call.1} parent=55 // pred_region
          %410 = dma.done %s403, 128
        $region68: #{tpu_custom_call.1} parent=55 // pred_fallthru
          _
        // Predicated region
        $region69: #{tpu_custom_call.1} parent=55 // pred_check
          %p411 = pneg %p125
        $region70: #{tpu_custom_call.1} parent=55 // pred_check_branch
          %413 = sbr.rel (%p411) target = $region72
        $region71: #{tpu_custom_call.1} parent=55 // pred_region
          %414 = dma.done [#allocation9], 1024
        $region72: #{tpu_custom_call.1} parent=55 // pred_fallthru
          _
        // Predicated region
        $region73: #{tpu_custom_call.1} parent=55 // pred_check
          %p415 = pneg %p167
        $region74: #{tpu_custom_call.1} parent=55 // pred_check_branch
          %417 = sbr.rel (%p415) target = $region76
        $region75: #{tpu_custom_call.1} parent=55 // pred_region
          %418 = dma.done [#allocation9], 1024
        $region76: #{tpu_custom_call.1} parent=55 // pred_fallthru
          _
        // Predicated region
        $region77: #{tpu_custom_call.1} parent=55 // pred_check
          %p419 = pneg %p209
        $region78: #{tpu_custom_call.1} parent=55 // pred_check_branch
          %421 = sbr.rel (%p419) target = $region80
        $region79: #{tpu_custom_call.1} parent=55 // pred_region
          %422 = dma.done [#allocation12], 1024
        $region80: #{tpu_custom_call.1} parent=55 // pred_fallthru
          _
        %s423 = sand.u32 %s39, 1
        %s424 = scalar_lea.sflag [#allocation3], %s423
        %s425 = sand.u32 %s39, 1
        %s426 = smul.addr %s425, 8
        %s427 = scalar_lea.vmem [#allocation2], %s426
        %p428 = pneg %p52
        %p429 = pneg %p49
        %s430 = sand.u32 %s31, 1
        %s431 = scalar_lea.sflag [#allocation6], %s430
        %s432 = sand.u32 %s65, 1
        %s433 = smul.addr %s432, 8
        %s434 = scalar_lea.vmem [#allocation5], %s433
        %p435 = pneg %p78
        %p436 = pneg %p75
        %s437 = sand.u32 %s31, 1
        %s438 = scalar_lea.sflag [#allocation6], %s437
        %s439 = sand.u32 %s91, 1
        %s440 = smul.addr %s439, 8
        %s441 = scalar_lea.vmem [#allocation7], %s440
        %p442 = pneg %p104
        %p443 = pneg %p101
        %p444 = pneg %p125
        %p445 = pneg %p122
        %p446 = pneg %p146
        %p447 = pneg %p143
        %p448 = pneg %p167
        %p449 = pneg %p164
        %p450 = pneg %p188
        %p451 = pneg %p185
        %p452 = pneg %p209
        %p453 = pneg %p206
        %p454 = pneg %p230
        %p455 = pneg %p227
        %p456 = pneg %p256
        %p457 = pneg %p253
        %s458 = sand.u32 %s243, 1
        %s459 = scalar_lea.sflag [#allocation4], %s458
        %s460 = sand.u32 %s243, 1
        %s461 = smul.addr %s460, 8
        %s462 = scalar_lea.vmem [#allocation13], %s461
        %v464 = vld [vmem:[%s388] sm:$0xff]
        %v465 = vpack.c.bf16 %v464, %v464
        %v466 = vld [vmem:[%s397] sm:$0xff]
        %v467 = vpack.c.bf16 %v466, %v466
        %v468 = vld [vmem:[%s406] sm:$0xff]
        %v469 = vpack.c.bf16 %v468, %v468
        %v470 = vld [vmem:[#allocation8] sm:$0xf]
        %v471 = vld [vmem:[#allocation8 + $0x4] sm:$0xf]
        %v472 = vld [vmem:[#allocation8 + $0x8] sm:$0xf]
        %v473 = vld [vmem:[#allocation8 + $0xc] sm:$0xf]
        %v474 = vld [vmem:[#allocation8 + $0x10] sm:$0xf]
        %v475 = vld [vmem:[#allocation8 + $0x14] sm:$0xf]
        %v476 = vld [vmem:[#allocation8 + $0x18] sm:$0xf]
        %v477 = vld [vmem:[#allocation8 + $0x1c] sm:$0xf]
        %v478 = vld [vmem:[#allocation8 + $0x20] sm:$0xf]
        %v479 = vld [vmem:[#allocation8 + $0x24] sm:$0xf]
        %v480 = vld [vmem:[#allocation8 + $0x28] sm:$0xf]
        %v481 = vld [vmem:[#allocation8 + $0x2c] sm:$0xf]
        %v482 = vld [vmem:[#allocation8 + $0x30] sm:$0xf]
        %v483 = vld [vmem:[#allocation8 + $0x34] sm:$0xf]
        %v484 = vld [vmem:[#allocation8 + $0x38] sm:$0xf]
        %v485 = vld [vmem:[#allocation8 + $0x3c] sm:$0xf]
        %v486 = vld [vmem:[%s4] sm:$0x1]
        %v488 = vlaneseq
        %v489 = vshrl.u32 %v488, 7
        %v490 = vsub.s32 0, %v489
        %v491 = vrot.slane %v486, %v490
        %v509 = vunpack.c.l.b16 %v470
        %v510 = vunpack.c.l.b16 %v471
        %v511 = vunpack.c.l.b16 %v472
        %v512 = vunpack.c.l.b16 %v473
        %v513 = vunpack.c.l.b16 %v474
        %v514 = vunpack.c.l.b16 %v475
        %v515 = vunpack.c.l.b16 %v476
        %v516 = vunpack.c.l.b16 %v477
        %v517 = vunpack.c.l.b16 %v478
        %v518 = vunpack.c.l.b16 %v479
        %v519 = vunpack.c.l.b16 %v480
        %v520 = vunpack.c.l.b16 %v481
        %v521 = vunpack.c.l.b16 %v482
        %v522 = vunpack.c.l.b16 %v483
        %v523 = vunpack.c.l.b16 %v484
        %v524 = vunpack.c.l.b16 %v485
        %v525 = vpack.c.b16 %v510, %v509
        %v526 = vpack.c.b16 %v512, %v511
        %v527 = vpack.c.b16 %v514, %v513
        %v528 = vpack.c.b16 %v516, %v515
        %v529 = vpack.c.b16 %v518, %v517
        %v530 = vpack.c.b16 %v520, %v519
        %v531 = vpack.c.b16 %v522, %v521
        %v532 = vpack.c.b16 %v524, %v523
        %541 = vmatprep.subr.bf16.mxu0 0
        %542 = vmatpush1.bf16.msra.mxu0 %v525
        %543 = vmatprep.subr.bf16.mxu0 0
        %544 = vmatpush1.bf16.msra.mxu0 %v526
        %545 = vmatprep.subr.bf16.mxu0 0
        %546 = vmatpush1.bf16.msra.mxu0 %v527
        %547 = vmatprep.subr.bf16.mxu0 0
        %548 = vmatpush1.bf16.msra.mxu0 %v528
        %549 = vmatprep.subr.bf16.mxu0 0
        %550 = vmatpush1.bf16.msra.mxu0 %v529
        %551 = vmatprep.subr.bf16.mxu0 0
        %552 = vmatpush1.bf16.msra.mxu0 %v530
        %553 = vmatprep.subr.bf16.mxu0 0
        %554 = vmatpush1.bf16.msra.mxu0 %v531
        %555 = vmatprep.subr.bf16.mxu0 0
        %556 = vmatpush1.bf16.msra.mxu0 %v532
        %557 = vmatprep.subr.bf16.mxu0 0
        %558 = vmatpush1.bf16.msra.mxu0 0
        %559 = vmatprep.subr.bf16.mxu0 0
        %560 = vmatpush1.bf16.msra.mxu0 0
        %561 = vmatprep.subr.bf16.mxu0 0
        %562 = vmatpush1.bf16.msra.mxu0 0
        %563 = vmatprep.subr.bf16.mxu0 0
        %564 = vmatpush1.bf16.msra.mxu0 0
        %565 = vmatprep.subr.bf16.mxu0 0
        %566 = vmatpush1.bf16.msra.mxu0 0
        %567 = vmatprep.subr.bf16.mxu0 0
        %568 = vmatpush1.bf16.msra.mxu0 0
        %569 = vmatprep.subr.bf16.mxu0 0
        %570 = vmatpush1.bf16.msra.mxu0 0
        %571 = vmatprep.subr.bf16.mxu0 0
        %572 = vmatpush1.bf16.msra.mxu0 0
        %573 = vmatprep.mubr.bf16.mxu0 0
        %574 = vmatmul.mubr.bf16.gmra.mrb[0].mxu0 %v465
        %v575 = vpop.f32.mrb[0].mxu0
        %v576 = vadd.f32 %v491, %v575
        %v577 = vpop.f32.mrb[0].mxu0
        %v578 = vpop.f32.mrb[0].mxu0
        %v579 = vpop.f32.mrb[0].mxu0
        %580 = vdwg.mxu0
        %v581 = vld [vmem:[#allocation10] sm:$0xf]
        %v582 = vld [vmem:[#allocation10 + $0x4] sm:$0xf]
        %v583 = vld [vmem:[#allocation10 + $0x8] sm:$0xf]
        %v584 = vld [vmem:[#allocation10 + $0xc] sm:$0xf]
        %v585 = vld [vmem:[#allocation10 + $0x10] sm:$0xf]
        %v586 = vld [vmem:[#allocation10 + $0x14] sm:$0xf]
        %v587 = vld [vmem:[#allocation10 + $0x18] sm:$0xf]
        %v588 = vld [vmem:[#allocation10 + $0x1c] sm:$0xf]
        %v589 = vld [vmem:[#allocation10 + $0x20] sm:$0xf]
        %v590 = vld [vmem:[#allocation10 + $0x24] sm:$0xf]
        %v591 = vld [vmem:[#allocation10 + $0x28] sm:$0xf]
        %v592 = vld [vmem:[#allocation10 + $0x2c] sm:$0xf]
        %v593 = vld [vmem:[#allocation10 + $0x30] sm:$0xf]
        %v594 = vld [vmem:[#allocation10 + $0x34] sm:$0xf]
        %v595 = vld [vmem:[#allocation10 + $0x38] sm:$0xf]
        %v596 = vld [vmem:[#allocation10 + $0x3c] sm:$0xf]
        %v597 = vld [vmem:[%s6] sm:$0x1]
        %v599 = vlaneseq
        %v600 = vshrl.u32 %v599, 7
        %v601 = vsub.s32 0, %v600
        %v602 = vrot.slane %v597, %v601
        %v620 = vunpack.c.l.b16 %v581
        %v621 = vunpack.c.l.b16 %v582
        %v622 = vunpack.c.l.b16 %v583
        %v623 = vunpack.c.l.b16 %v584
        %v624 = vunpack.c.l.b16 %v585
        %v625 = vunpack.c.l.b16 %v586
        %v626 = vunpack.c.l.b16 %v587
        %v627 = vunpack.c.l.b16 %v588
        %v628 = vunpack.c.l.b16 %v589
        %v629 = vunpack.c.l.b16 %v590
        %v630 = vunpack.c.l.b16 %v591
        %v631 = vunpack.c.l.b16 %v592
        %v632 = vunpack.c.l.b16 %v593
        %v633 = vunpack.c.l.b16 %v594
        %v634 = vunpack.c.l.b16 %v595
        %v635 = vunpack.c.l.b16 %v596
        %v636 = vpack.c.b16 %v621, %v620
        %v637 = vpack.c.b16 %v623, %v622
        %v638 = vpack.c.b16 %v625, %v624
        %v639 = vpack.c.b16 %v627, %v626
        %v640 = vpack.c.b16 %v629, %v628
        %v641 = vpack.c.b16 %v631, %v630
        %v642 = vpack.c.b16 %v633, %v632
        %v643 = vpack.c.b16 %v635, %v634
        %652 = vmatprep.subr.bf16.mxu0 0
        %653 = vmatpush1.bf16.msra.mxu0 %v636
        %654 = vmatprep.subr.bf16.mxu0 0
        %655 = vmatpush1.bf16.msra.mxu0 %v637
        %656 = vmatprep.subr.bf16.mxu0 0
        %657 = vmatpush1.bf16.msra.mxu0 %v638
        %658 = vmatprep.subr.bf16.mxu0 0
        %659 = vmatpush1.bf16.msra.mxu0 %v639
        %660 = vmatprep.subr.bf16.mxu0 0
        %661 = vmatpush1.bf16.msra.mxu0 %v640
        %662 = vmatprep.subr.bf16.mxu0 0
        %663 = vmatpush1.bf16.msra.mxu0 %v641
        %664 = vmatprep.subr.bf16.mxu0 0
        %665 = vmatpush1.bf16.msra.mxu0 %v642
        %666 = vmatprep.subr.bf16.mxu0 0
        %667 = vmatpush1.bf16.msra.mxu0 %v643
        %668 = vmatprep.subr.bf16.mxu0 0
        %669 = vmatpush1.bf16.msra.mxu0 0
        %670 = vmatprep.subr.bf16.mxu0 0
        %671 = vmatpush1.bf16.msra.mxu0 0
        %672 = vmatprep.subr.bf16.mxu0 0
        %673 = vmatpush1.bf16.msra.mxu0 0
        %674 = vmatprep.subr.bf16.mxu0 0
        %675 = vmatpush1.bf16.msra.mxu0 0
        %676 = vmatprep.subr.bf16.mxu0 0
        %677 = vmatpush1.bf16.msra.mxu0 0
        %678 = vmatprep.subr.bf16.mxu0 0
        %679 = vmatpush1.bf16.msra.mxu0 0
        %680 = vmatprep.subr.bf16.mxu0 0
        %681 = vmatpush1.bf16.msra.mxu0 0
        %682 = vmatprep.subr.bf16.mxu0 0
        %683 = vmatpush1.bf16.msra.mxu0 0
        %684 = vmatprep.mubr.bf16.mxu0 0
        %685 = vmatmul.mubr.bf16.gmra.mrb[0].mxu0 %v467
        %v686 = vpop.f32.mrb[0].mxu0
        %v687 = vadd.f32 %v602, %v686
        %v688 = vpop.f32.mrb[0].mxu0
        %v689 = vpop.f32.mrb[0].mxu0
        %v690 = vpop.f32.mrb[0].mxu0
        %691 = vdwg.mxu0
        %v692 = vld [vmem:[#allocation11] sm:$0xf]
        %v693 = vld [vmem:[#allocation11 + $0x4] sm:$0xf]
        %v694 = vld [vmem:[#allocation11 + $0x8] sm:$0xf]
        %v695 = vld [vmem:[#allocation11 + $0xc] sm:$0xf]
        %v696 = vld [vmem:[#allocation11 + $0x10] sm:$0xf]
        %v697 = vld [vmem:[#allocation11 + $0x14] sm:$0xf]
        %v698 = vld [vmem:[#allocation11 + $0x18] sm:$0xf]
        %v699 = vld [vmem:[#allocation11 + $0x1c] sm:$0xf]
        %v700 = vld [vmem:[#allocation11 + $0x20] sm:$0xf]
        %v701 = vld [vmem:[#allocation11 + $0x24] sm:$0xf]
        %v702 = vld [vmem:[#allocation11 + $0x28] sm:$0xf]
        %v703 = vld [vmem:[#allocation11 + $0x2c] sm:$0xf]
        %v704 = vld [vmem:[#allocation11 + $0x30] sm:$0xf]
        %v705 = vld [vmem:[#allocation11 + $0x34] sm:$0xf]
        %v706 = vld [vmem:[#allocation11 + $0x38] sm:$0xf]
        %v707 = vld [vmem:[#allocation11 + $0x3c] sm:$0xf]
        %v708 = vld [vmem:[%s8] sm:$0x1]
        %v710 = vlaneseq
        %v711 = vshrl.u32 %v710, 7
        %v712 = vsub.s32 0, %v711
        %v713 = vrot.slane %v708, %v712
        %v731 = vunpack.c.l.b16 %v692
        %v732 = vunpack.c.l.b16 %v693
        %v733 = vunpack.c.l.b16 %v694
        %v734 = vunpack.c.l.b16 %v695
        %v735 = vunpack.c.l.b16 %v696
        %v736 = vunpack.c.l.b16 %v697
        %v737 = vunpack.c.l.b16 %v698
        %v738 = vunpack.c.l.b16 %v699
        %v739 = vunpack.c.l.b16 %v700
        %v740 = vunpack.c.l.b16 %v701
        %v741 = vunpack.c.l.b16 %v702
        %v742 = vunpack.c.l.b16 %v703
        %v743 = vunpack.c.l.b16 %v704
        %v744 = vunpack.c.l.b16 %v705
        %v745 = vunpack.c.l.b16 %v706
        %v746 = vunpack.c.l.b16 %v707
        %v747 = vpack.c.b16 %v732, %v731
        %v748 = vpack.c.b16 %v734, %v733
        %v749 = vpack.c.b16 %v736, %v735
        %v750 = vpack.c.b16 %v738, %v737
        %v751 = vpack.c.b16 %v740, %v739
        %v752 = vpack.c.b16 %v742, %v741
        %v753 = vpack.c.b16 %v744, %v743
        %v754 = vpack.c.b16 %v746, %v745
        %763 = vmatprep.subr.bf16.mxu0 0
        %764 = vmatpush1.bf16.msra.mxu0 %v747
        %765 = vmatprep.subr.bf16.mxu0 0
        %766 = vmatpush1.bf16.msra.mxu0 %v748
        %767 = vmatprep.subr.bf16.mxu0 0
        %768 = vmatpush1.bf16.msra.mxu0 %v749
        %769 = vmatprep.subr.bf16.mxu0 0
        %770 = vmatpush1.bf16.msra.mxu0 %v750
        %771 = vmatprep.subr.bf16.mxu0 0
        %772 = vmatpush1.bf16.msra.mxu0 %v751
        %773 = vmatprep.subr.bf16.mxu0 0
        %774 = vmatpush1.bf16.msra.mxu0 %v752
        %775 = vmatprep.subr.bf16.mxu0 0
        %776 = vmatpush1.bf16.msra.mxu0 %v753
        %777 = vmatprep.subr.bf16.mxu0 0
        %778 = vmatpush1.bf16.msra.mxu0 %v754
        %779 = vmatprep.subr.bf16.mxu0 0
        %780 = vmatpush1.bf16.msra.mxu0 0
        %781 = vmatprep.subr.bf16.mxu0 0
        %782 = vmatpush1.bf16.msra.mxu0 0
        %783 = vmatprep.subr.bf16.mxu0 0
        %784 = vmatpush1.bf16.msra.mxu0 0
        %785 = vmatprep.subr.bf16.mxu0 0
        %786 = vmatpush1.bf16.msra.mxu0 0
        %787 = vmatprep.subr.bf16.mxu0 0
        %788 = vmatpush1.bf16.msra.mxu0 0
        %789 = vmatprep.subr.bf16.mxu0 0
        %790 = vmatpush1.bf16.msra.mxu0 0
        %791 = vmatprep.subr.bf16.mxu0 0
        %792 = vmatpush1.bf16.msra.mxu0 0
        %793 = vmatprep.subr.bf16.mxu0 0
        %794 = vmatpush1.bf16.msra.mxu0 0
        %795 = vmatprep.mubr.bf16.mxu0 0
        %796 = vmatmul.mubr.bf16.gmra.mrb[0].mxu0 %v469
        %v797 = vpop.f32.mrb[0].mxu0
        %v798 = vadd.f32 %v713, %v797
        %v799 = vpop.f32.mrb[0].mxu0
        %v800 = vpop.f32.mrb[0].mxu0
        %v801 = vpop.f32.mrb[0].mxu0
        %802 = vdwg.mxu0
        %v803 = vpack.c.bf16 %v576, %v576
        %v804 = vpack.c.bf16 %v687, %v687
        %v805 = vpack.c.bf16 %v798, %v798
        %vm806 = vcmask 261120
        %v808 = vsel %vm806, %v803, 0
        %v811 = vsel %vm806, %v804, 0
        %813 = vmatprep.subr.bf16.mxu0 0
        %814 = vmatpush1.bf16.xpose.msra.mxu0 %v811
        %815 = vmatprep.subr.bf16.mxu0 0
        %816 = vmatpush1.bf16.xpose.msra.mxu0 0
        %817 = vmatprep.subr.bf16.mxu0 0
        %818 = vmatpush1.bf16.xpose.msra.mxu0 0
        %819 = vmatprep.subr.bf16.mxu0 0
        %820 = vmatpush1.bf16.xpose.msra.mxu0 0
        %821 = vmatprep.subr.bf16.mxu0 0
        %822 = vmatpush1.bf16.xpose.msra.mxu0 0
        %823 = vmatprep.subr.bf16.mxu0 0
        %824 = vmatpush1.bf16.xpose.msra.mxu0 0
        %825 = vmatprep.subr.bf16.mxu0 0
        %826 = vmatpush1.bf16.xpose.msra.mxu0 0
        %827 = vmatprep.subr.bf16.mxu0 0
        %828 = vmatpush1.bf16.xpose.msra.mxu0 0
        %829 = vmatprep.subr.bf16.mxu0 0
        %830 = vmatpush1.bf16.xpose.msra.mxu0 0
        %831 = vmatprep.subr.bf16.mxu0 0
        %832 = vmatpush1.bf16.xpose.msra.mxu0 0
        %833 = vmatprep.subr.bf16.mxu0 0
        %834 = vmatpush1.bf16.xpose.msra.mxu0 0
        %835 = vmatprep.subr.bf16.mxu0 0
        %836 = vmatpush1.bf16.xpose.msra.mxu0 0
        %837 = vmatprep.subr.bf16.mxu0 0
        %838 = vmatpush1.bf16.xpose.msra.mxu0 0
        %839 = vmatprep.subr.bf16.mxu0 0
        %840 = vmatpush1.bf16.xpose.msra.mxu0 0
        %841 = vmatprep.subr.bf16.mxu0 0
        %842 = vmatpush1.bf16.xpose.msra.mxu0 0
        %843 = vmatprep.subr.bf16.mxu0 0
        %844 = vmatpush1.bf16.xpose.msra.mxu0 0
        %845 = vmatprep.mubr.bf16.mxu0 0
        %846 = vmatmul.mubr.bf16.gmra.mrb[0].mxu0 %v808
        %v847 = vpop.f32.mrb[0].mxu0
        %v848 = vadd.f32 0.0, %v847
        %v849 = vpop.f32.mrb[0].mxu0
        %v850 = vpop.f32.mrb[0].mxu0
        %v851 = vpop.f32.mrb[0].mxu0
        %852 = vdwg.mxu0
        %v853 = vmul.f32 %v848, 0.17677669
        %vm854 = vcmask 64512
        %v855 = vsel %vm854, %v853, -inf
        %856 = vmax.xlane.f32.xlu0 %v855
        %v857 = vpop.xlane.xlu0 %856
        %v858 = vsub.f32 %v853, %v857
        %v859 = vmul.f32 %v858, 1.442695
        %v860 = vpow.pop %v859
        %v861 = vsel %vm854, %v860, 0.0
        %862 = vadd.xlane.f32.xlu0 %v861
        %v863 = vpop.xlane.xlu0 %862
        %v864 = vrcp.pop %v863
        %v865 = vmul.f32 %v860, %v864
        %v866 = vpack.c.bf16 %v865, %v865
        %v868 = vsel %vm854, %v866, 0
        %vm870 = vcmask 1043456
        %v872 = vsel %vm870, %v805, 0
        %874 = vmatprep.subr.bf16.mxu0 0
        %875 = vmatpush1.bf16.msra.mxu0 %v872
        %876 = vmatprep.subr.bf16.mxu0 0
        %877 = vmatpush1.bf16.msra.mxu0 0
        %878 = vmatprep.subr.bf16.mxu0 0
        %879 = vmatpush1.bf16.msra.mxu0 0
        %880 = vmatprep.subr.bf16.mxu0 0
        %881 = vmatpush1.bf16.msra.mxu0 0
        %882 = vmatprep.subr.bf16.mxu0 0
        %883 = vmatpush1.bf16.msra.mxu0 0
        %884 = vmatprep.subr.bf16.mxu0 0
        %885 = vmatpush1.bf16.msra.mxu0 0
        %886 = vmatprep.subr.bf16.mxu0 0
        %887 = vmatpush1.bf16.msra.mxu0 0
        %888 = vmatprep.subr.bf16.mxu0 0
        %889 = vmatpush1.bf16.msra.mxu0 0
        %890 = vmatprep.subr.bf16.mxu0 0
        %891 = vmatpush1.bf16.msra.mxu0 0
        %892 = vmatprep.subr.bf16.mxu0 0
        %893 = vmatpush1.bf16.msra.mxu0 0
        %894 = vmatprep.subr.bf16.mxu0 0
        %895 = vmatpush1.bf16.msra.mxu0 0
        %896 = vmatprep.subr.bf16.mxu0 0
        %897 = vmatpush1.bf16.msra.mxu0 0
        %898 = vmatprep.subr.bf16.mxu0 0
        %899 = vmatpush1.bf16.msra.mxu0 0
        %900 = vmatprep.subr.bf16.mxu0 0
        %901 = vmatpush1.bf16.msra.mxu0 0
        %902 = vmatprep.subr.bf16.mxu0 0
        %903 = vmatpush1.bf16.msra.mxu0 0
        %904 = vmatprep.subr.bf16.mxu0 0
        %905 = vmatpush1.bf16.msra.mxu0 0
        %906 = vmatprep.mubr.bf16.mxu0 0
        %907 = vmatmul.mubr.bf16.gmra.mrb[0].mxu0 %v868
        %v908 = vpop.f32.mrb[0].mxu0
        %v909 = vadd.f32 0.0, %v908
        %v910 = vpop.f32.mrb[0].mxu0
        %v911 = vpop.f32.mrb[0].mxu0
        %v912 = vpop.f32.mrb[0].mxu0
        %913 = vdwg.mxu0
        %915 = vrot.lane.b32.xlu0 %v803, 96
        %v916 = vpop.permute.xlu0 %915
        %918 = vrot.lane.b32.xlu0 %v804, 96
        %v919 = vpop.permute.xlu0 %918
        %v921 = vsel %vm806, %v916, 0
        %v924 = vsel %vm806, %v919, 0
        %926 = vmatprep.subr.bf16.mxu0 0
        %927 = vmatpush1.bf16.xpose.msra.mxu0 %v924
        %928 = vmatprep.subr.bf16.mxu0 0
        %929 = vmatpush1.bf16.xpose.msra.mxu0 0
        %930 = vmatprep.subr.bf16.mxu0 0
        %931 = vmatpush1.bf16.xpose.msra.mxu0 0
        %932 = vmatprep.subr.bf16.mxu0 0
        %933 = vmatpush1.bf16.xpose.msra.mxu0 0
        %934 = vmatprep.subr.bf16.mxu0 0
        %935 = vmatpush1.bf16.xpose.msra.mxu0 0
        %936 = vmatprep.subr.bf16.mxu0 0
        %937 = vmatpush1.bf16.xpose.msra.mxu0 0
        %938 = vmatprep.subr.bf16.mxu0 0
        %939 = vmatpush1.bf16.xpose.msra.mxu0 0
        %940 = vmatprep.subr.bf16.mxu0 0
        %941 = vmatpush1.bf16.xpose.msra.mxu0 0
        %942 = vmatprep.subr.bf16.mxu0 0
        %943 = vmatpush1.bf16.xpose.msra.mxu0 0
        %944 = vmatprep.subr.bf16.mxu0 0
        %945 = vmatpush1.bf16.xpose.msra.mxu0 0
        %946 = vmatprep.subr.bf16.mxu0 0
        %947 = vmatpush1.bf16.xpose.msra.mxu0 0
        %948 = vmatprep.subr.bf16.mxu0 0
        %949 = vmatpush1.bf16.xpose.msra.mxu0 0
        %950 = vmatprep.subr.bf16.mxu0 0
        %951 = vmatpush1.bf16.xpose.msra.mxu0 0
        %952 = vmatprep.subr.bf16.mxu0 0
        %953 = vmatpush1.bf16.xpose.msra.mxu0 0
        %954 = vmatprep.subr.bf16.mxu0 0
        %955 = vmatpush1.bf16.xpose.msra.mxu0 0
        %956 = vmatprep.subr.bf16.mxu0 0
        %957 = vmatpush1.bf16.xpose.msra.mxu0 0
        %958 = vmatprep.mubr.bf16.mxu0 0
        %959 = vmatmul.mubr.bf16.gmra.mrb[0].mxu0 %v921
        %v960 = vpop.f32.mrb[0].mxu0
        %v961 = vadd.f32 0.0, %v960
        %v962 = vpop.f32.mrb[0].mxu0
        %v963 = vpop.f32.mrb[0].mxu0
        %v964 = vpop.f32.mrb[0].mxu0
        %965 = vdwg.mxu0
        %v966 = vmul.f32 %v961, 0.17677669
        %v967 = vsel %vm854, %v966, -inf
        %968 = vmax.xlane.f32.xlu0 %v967
        %v969 = vpop.xlane.xlu0 %968
        %v970 = vsub.f32 %v966, %v969
        %v971 = vmul.f32 %v970, 1.442695
        %v972 = vpow.pop %v971
        %v973 = vsel %vm854, %v972, 0.0
        %974 = vadd.xlane.f32.xlu0 %v973
        %v975 = vpop.xlane.xlu0 %974
        %v976 = vrcp.pop %v975
        %v977 = vmul.f32 %v972, %v976
        %v978 = vpack.c.bf16 %v977, %v977
        %980 = vrot.lane.b32.xlu0 %v805, 96
        %v981 = vpop.permute.xlu0 %980
        %v983 = vsel %vm854, %v978, 0
        %v986 = vsel %vm870, %v981, 0
        %988 = vmatprep.subr.bf16.mxu0 0
        %989 = vmatpush1.bf16.msra.mxu0 %v986
        %990 = vmatprep.subr.bf16.mxu0 0
        %991 = vmatpush1.bf16.msra.mxu0 0
        %992 = vmatprep.subr.bf16.mxu0 0
        %993 = vmatpush1.bf16.msra.mxu0 0
        %994 = vmatprep.subr.bf16.mxu0 0
        %995 = vmatpush1.bf16.msra.mxu0 0
        %996 = vmatprep.subr.bf16.mxu0 0
        %997 = vmatpush1.bf16.msra.mxu0 0
        %998 = vmatprep.subr.bf16.mxu0 0
        %999 = vmatpush1.bf16.msra.mxu0 0
        %1000 = vmatprep.subr.bf16.mxu0 0
        %1001 = vmatpush1.bf16.msra.mxu0 0
        %1002 = vmatprep.subr.bf16.mxu0 0
        %1003 = vmatpush1.bf16.msra.mxu0 0
        %1004 = vmatprep.subr.bf16.mxu0 0
        %1005 = vmatpush1.bf16.msra.mxu0 0
        %1006 = vmatprep.subr.bf16.mxu0 0
        %1007 = vmatpush1.bf16.msra.mxu0 0
        %1008 = vmatprep.subr.bf16.mxu0 0
        %1009 = vmatpush1.bf16.msra.mxu0 0
        %1010 = vmatprep.subr.bf16.mxu0 0
        %1011 = vmatpush1.bf16.msra.mxu0 0
        %1012 = vmatprep.subr.bf16.mxu0 0
        %1013 = vmatpush1.bf16.msra.mxu0 0
        %1014 = vmatprep.subr.bf16.mxu0 0
        %1015 = vmatpush1.bf16.msra.mxu0 0
        %1016 = vmatprep.subr.bf16.mxu0 0
        %1017 = vmatpush1.bf16.msra.mxu0 0
        %1018 = vmatprep.subr.bf16.mxu0 0
        %1019 = vmatpush1.bf16.msra.mxu0 0
        %1020 = vmatprep.mubr.bf16.mxu0 0
        %1021 = vmatmul.mubr.bf16.gmra.mrb[0].mxu0 %v983
        %v1022 = vpop.f32.mrb[0].mxu0
        %v1023 = vadd.f32 0.0, %v1022
        %v1024 = vpop.f32.mrb[0].mxu0
        %v1025 = vpop.f32.mrb[0].mxu0
        %v1026 = vpop.f32.mrb[0].mxu0
        %1027 = vdwg.mxu0
        %1028 = vrot.lane.b32.xlu0 %v803, 64
        %v1029 = vpop.permute.xlu0 %1028
        %1030 = vrot.lane.b32.xlu0 %v804, 64
        %v1031 = vpop.permute.xlu0 %1030
        %v1033 = vsel %vm806, %v1029, 0
        %v1036 = vsel %vm806, %v1031, 0
        %1038 = vmatprep.subr.bf16.mxu0 0
        %1039 = vmatpush1.bf16.xpose.msra.mxu0 %v1036
        %1040 = vmatprep.subr.bf16.mxu0 0
        %1041 = vmatpush1.bf16.xpose.msra.mxu0 0
        %1042 = vmatprep.subr.bf16.mxu0 0
        %1043 = vmatpush1.bf16.xpose.msra.mxu0 0
        %1044 = vmatprep.subr.bf16.mxu0 0
        %1045 = vmatpush1.bf16.xpose.msra.mxu0 0
        %1046 = vmatprep.subr.bf16.mxu0 0
        %1047 = vmatpush1.bf16.xpose.msra.mxu0 0
        %1048 = vmatprep.subr.bf16.mxu0 0
        %1049 = vmatpush1.bf16.xpose.msra.mxu0 0
        %1050 = vmatprep.subr.bf16.mxu0 0
        %1051 = vmatpush1.bf16.xpose.msra.mxu0 0
        %1052 = vmatprep.subr.bf16.mxu0 0
        %1053 = vmatpush1.bf16.xpose.msra.mxu0 0
        %1054 = vmatprep.subr.bf16.mxu0 0
        %1055 = vmatpush1.bf16.xpose.msra.mxu0 0
        %1056 = vmatprep.subr.bf16.mxu0 0
        %1057 = vmatpush1.bf16.xpose.msra.mxu0 0
        %1058 = vmatprep.subr.bf16.mxu0 0
        %1059 = vmatpush1.bf16.xpose.msra.mxu0 0
        %1060 = vmatprep.subr.bf16.mxu0 0
        %1061 = vmatpush1.bf16.xpose.msra.mxu0 0
        %1062 = vmatprep.subr.bf16.mxu0 0
        %1063 = vmatpush1.bf16.xpose.msra.mxu0 0
        %1064 = vmatprep.subr.bf16.mxu0 0
        %1065 = vmatpush1.bf16.xpose.msra.mxu0 0
        %1066 = vmatprep.subr.bf16.mxu0 0
        %1067 = vmatpush1.bf16.xpose.msra.mxu0 0
        %1068 = vmatprep.subr.bf16.mxu0 0
        %1069 = vmatpush1.bf16.xpose.msra.mxu0 0
        %1070 = vmatprep.mubr.bf16.mxu0 0
        %1071 = vmatmul.mubr.bf16.gmra.mrb[0].mxu0 %v1033
        %v1072 = vpop.f32.mrb[0].mxu0
        %v1073 = vadd.f32 0.0, %v1072
        %v1074 = vpop.f32.mrb[0].mxu0
        %v1075 = vpop.f32.mrb[0].mxu0
        %v1076 = vpop.f32.mrb[0].mxu0
        %1077 = vdwg.mxu0
        %v1078 = vmul.f32 %v1073, 0.17677669
        %v1079 = vsel %vm854, %v1078, -inf
        %1080 = vmax.xlane.f32.xlu0 %v1079
        %v1081 = vpop.xlane.xlu0 %1080
        %v1082 = vsub.f32 %v1078, %v1081
        %v1083 = vmul.f32 %v1082, 1.442695
        %v1084 = vpow.pop %v1083
        %v1085 = vsel %vm854, %v1084, 0.0
        %1086 = vadd.xlane.f32.xlu0 %v1085
        %v1087 = vpop.xlane.xlu0 %1086
        %v1088 = vrcp.pop %v1087
        %v1089 = vmul.f32 %v1084, %v1088
        %v1090 = vpack.c.bf16 %v1089, %v1089
        %1091 = vrot.lane.b32.xlu0 %v805, 64
        %v1092 = vpop.permute.xlu0 %1091
        %v1094 = vsel %vm854, %v1090, 0
        %v1097 = vsel %vm870, %v1092, 0
        %1099 = vmatprep.subr.bf16.mxu0 0
        %1100 = vmatpush1.bf16.msra.mxu0 %v1097
        %1101 = vmatprep.subr.bf16.mxu0 0
        %1102 = vmatpush1.bf16.msra.mxu0 0
        %1103 = vmatprep.subr.bf16.mxu0 0
        %1104 = vmatpush1.bf16.msra.mxu0 0
        %1105 = vmatprep.subr.bf16.mxu0 0
        %1106 = vmatpush1.bf16.msra.mxu0 0
        %1107 = vmatprep.subr.bf16.mxu0 0
        %1108 = vmatpush1.bf16.msra.mxu0 0
        %1109 = vmatprep.subr.bf16.mxu0 0
        %1110 = vmatpush1.bf16.msra.mxu0 0
        %1111 = vmatprep.subr.bf16.mxu0 0
        %1112 = vmatpush1.bf16.msra.mxu0 0
        %1113 = vmatprep.subr.bf16.mxu0 0
        %1114 = vmatpush1.bf16.msra.mxu0 0
        %1115 = vmatprep.subr.bf16.mxu0 0
        %1116 = vmatpush1.bf16.msra.mxu0 0
        %1117 = vmatprep.subr.bf16.mxu0 0
        %1118 = vmatpush1.bf16.msra.mxu0 0
        %1119 = vmatprep.subr.bf16.mxu0 0
        %1120 = vmatpush1.bf16.msra.mxu0 0
        %1121 = vmatprep.subr.bf16.mxu0 0
        %1122 = vmatpush1.bf16.msra.mxu0 0
        %1123 = vmatprep.subr.bf16.mxu0 0
        %1124 = vmatpush1.bf16.msra.mxu0 0
        %1125 = vmatprep.subr.bf16.mxu0 0
        %1126 = vmatpush1.bf16.msra.mxu0 0
        %1127 = vmatprep.subr.bf16.mxu0 0
        %1128 = vmatpush1.bf16.msra.mxu0 0
        %1129 = vmatprep.subr.bf16.mxu0 0
        %1130 = vmatpush1.bf16.msra.mxu0 0
        %1131 = vmatprep.mubr.bf16.mxu0 0
        %1132 = vmatmul.mubr.bf16.gmra.mrb[0].mxu0 %v1094
        %v1133 = vpop.f32.mrb[0].mxu0
        %v1134 = vadd.f32 0.0, %v1133
        %v1135 = vpop.f32.mrb[0].mxu0
        %v1136 = vpop.f32.mrb[0].mxu0
        %v1137 = vpop.f32.mrb[0].mxu0
        %1138 = vdwg.mxu0
        %1139 = vrot.lane.b32.xlu0 %v803, 32
        %v1140 = vpop.permute.xlu0 %1139
        %1141 = vrot.lane.b32.xlu0 %v804, 32
        %v1142 = vpop.permute.xlu0 %1141
        %v1144 = vsel %vm806, %v1140, 0
        %v1147 = vsel %vm806, %v1142, 0
        %1149 = vmatprep.subr.bf16.mxu0 0
        %1150 = vmatpush1.bf16.xpose.msra.mxu0 %v1147
        %1151 = vmatprep.subr.bf16.mxu0 0
        %1152 = vmatpush1.bf16.xpose.msra.mxu0 0
        %1153 = vmatprep.subr.bf16.mxu0 0
        %1154 = vmatpush1.bf16.xpose.msra.mxu0 0
        %1155 = vmatprep.subr.bf16.mxu0 0
        %1156 = vmatpush1.bf16.xpose.msra.mxu0 0
        %1157 = vmatprep.subr.bf16.mxu0 0
        %1158 = vmatpush1.bf16.xpose.msra.mxu0 0
        %1159 = vmatprep.subr.bf16.mxu0 0
        %1160 = vmatpush1.bf16.xpose.msra.mxu0 0
        %1161 = vmatprep.subr.bf16.mxu0 0
        %1162 = vmatpush1.bf16.xpose.msra.mxu0 0
        %1163 = vmatprep.subr.bf16.mxu0 0
        %1164 = vmatpush1.bf16.xpose.msra.mxu0 0
        %1165 = vmatprep.subr.bf16.mxu0 0
        %1166 = vmatpush1.bf16.xpose.msra.mxu0 0
        %1167 = vmatprep.subr.bf16.mxu0 0
        %1168 = vmatpush1.bf16.xpose.msra.mxu0 0
        %1169 = vmatprep.subr.bf16.mxu0 0
        %1170 = vmatpush1.bf16.xpose.msra.mxu0 0
        %1171 = vmatprep.subr.bf16.mxu0 0
        %1172 = vmatpush1.bf16.xpose.msra.mxu0 0
        %1173 = vmatprep.subr.bf16.mxu0 0
        %1174 = vmatpush1.bf16.xpose.msra.mxu0 0
        %1175 = vmatprep.subr.bf16.mxu0 0
        %1176 = vmatpush1.bf16.xpose.msra.mxu0 0
        %1177 = vmatprep.subr.bf16.mxu0 0
        %1178 = vmatpush1.bf16.xpose.msra.mxu0 0
        %1179 = vmatprep.subr.bf16.mxu0 0
        %1180 = vmatpush1.bf16.xpose.msra.mxu0 0
        %1181 = vmatprep.mubr.bf16.mxu0 0
        %1182 = vmatmul.mubr.bf16.gmra.mrb[0].mxu0 %v1144
        %v1183 = vpop.f32.mrb[0].mxu0
        %v1184 = vadd.f32 0.0, %v1183
        %v1185 = vpop.f32.mrb[0].mxu0
        %v1186 = vpop.f32.mrb[0].mxu0
        %v1187 = vpop.f32.mrb[0].mxu0
        %1188 = vdwg.mxu0
        %v1189 = vmul.f32 %v1184, 0.17677669
        %v1190 = vsel %vm854, %v1189, -inf
        %1191 = vmax.xlane.f32.xlu0 %v1190
        %v1192 = vpop.xlane.xlu0 %1191
        %v1193 = vsub.f32 %v1189, %v1192
        %v1194 = vmul.f32 %v1193, 1.442695
        %v1195 = vpow.pop %v1194
        %v1196 = vsel %vm854, %v1195, 0.0
        %1197 = vadd.xlane.f32.xlu0 %v1196
        %v1198 = vpop.xlane.xlu0 %1197
        %v1199 = vrcp.pop %v1198
        %v1200 = vmul.f32 %v1195, %v1199
        %v1201 = vpack.c.bf16 %v1200, %v1200
        %1202 = vrot.lane.b32.xlu0 %v805, 32
        %v1203 = vpop.permute.xlu0 %1202
        %v1205 = vsel %vm854, %v1201, 0
        %v1208 = vsel %vm870, %v1203, 0
        %1210 = vmatprep.subr.bf16.mxu0 0
        %1211 = vmatpush1.bf16.msra.mxu0 %v1208
        %1212 = vmatprep.subr.bf16.mxu0 0
        %1213 = vmatpush1.bf16.msra.mxu0 0
        %1214 = vmatprep.subr.bf16.mxu0 0
        %1215 = vmatpush1.bf16.msra.mxu0 0
        %1216 = vmatprep.subr.bf16.mxu0 0
        %1217 = vmatpush1.bf16.msra.mxu0 0
        %1218 = vmatprep.subr.bf16.mxu0 0
        %1219 = vmatpush1.bf16.msra.mxu0 0
        %1220 = vmatprep.subr.bf16.mxu0 0
        %1221 = vmatpush1.bf16.msra.mxu0 0
        %1222 = vmatprep.subr.bf16.mxu0 0
        %1223 = vmatpush1.bf16.msra.mxu0 0
        %1224 = vmatprep.subr.bf16.mxu0 0
        %1225 = vmatpush1.bf16.msra.mxu0 0
        %1226 = vmatprep.subr.bf16.mxu0 0
        %1227 = vmatpush1.bf16.msra.mxu0 0
        %1228 = vmatprep.subr.bf16.mxu0 0
        %1229 = vmatpush1.bf16.msra.mxu0 0
        %1230 = vmatprep.subr.bf16.mxu0 0
        %1231 = vmatpush1.bf16.msra.mxu0 0
        %1232 = vmatprep.subr.bf16.mxu0 0
        %1233 = vmatpush1.bf16.msra.mxu0 0
        %1234 = vmatprep.subr.bf16.mxu0 0
        %1235 = vmatpush1.bf16.msra.mxu0 0
        %1236 = vmatprep.subr.bf16.mxu0 0
        %1237 = vmatpush1.bf16.msra.mxu0 0
        %1238 = vmatprep.subr.bf16.mxu0 0
        %1239 = vmatpush1.bf16.msra.mxu0 0
        %1240 = vmatprep.subr.bf16.mxu0 0
        %1241 = vmatpush1.bf16.msra.mxu0 0
        %1242 = vmatprep.mubr.bf16.mxu0 0
        %1243 = vmatmul.mubr.bf16.gmra.mrb[0].mxu0 %v1205
        %v1244 = vpop.f32.mrb[0].mxu0
        %v1245 = vadd.f32 0.0, %v1244
        %v1246 = vpop.f32.mrb[0].mxu0
        %v1247 = vpop.f32.mrb[0].mxu0
        %v1248 = vpop.f32.mrb[0].mxu0
        %1249 = vdwg.mxu0
        %1251 = vrot.lane.b32.xlu0 %v1023, 32
        %v1252 = vpop.permute.xlu0 %1251
        %1255 = vrot.lane.b32.xlu0 %v1134, 64
        %v1256 = vpop.permute.xlu0 %1255
        %1259 = vrot.lane.b32.xlu0 %v1245, 96
        %v1260 = vpop.permute.xlu0 %1259
        %v1262 = vsel %vm806, %v909, %v1252
        %vm1263 = vcmask 523264
        %v1264 = vsel %vm1263, %v1262, %v1256
        %vm1265 = vcmask 785408
        %v1266 = vsel %vm1265, %v1264, %v1260
        %1267 = vst [vmem:[%s462] sm:$0xff] %v1266
        %s1268 = sand.u32 %s243, 1
        %s1269 = scalar_lea.sflag [#allocation4], %s1268
        %s1270 = sand.u32 %s243, 1
        %s1271 = smul.addr %s1270, 8
        %s1272 = scalar_lea.vmem [#allocation13], %s1271
        // Predicated region
        $region81: #{tpu_custom_call.1} parent=55 // pred_check
          %p1273 = pneg %p253
        $region82: #{tpu_custom_call.1} parent=55 // pred_check_branch
          %1275 = sbr.rel (%p1273) target = $region84
        $region83: #{tpu_custom_call.1} parent=55 // pred_region
          %s1277 = ssub.s32 128, 128
          %1278 = vsyncadd %s1269, %s1277
          %s1279 = smul.addr %s31, 128
          %s1280 = scalar_lea.hbm %s9, %s1279
          %s1282 = sshll.u32 %s1272, 4
          %s1283 = int_to_ptr.vmem [resolvable:$true] %s1282
          %1285 = dma.vmem_to_hbm [thread:$0]  %s1283, 128, %s1280, %s1269
        $region84: #{tpu_custom_call.1} parent=55 // pred_fallthru
          _
      $region56: #{tpu_custom_call.1} parent=5 // pred_fallthru
        _
      %p1286 = scmp.le.s32.totalorder 2, %s26
      // Predicated region
      $region85: #{tpu_custom_call.1} parent=5 // pred_check
        %p1287 = pneg %p1286
      $region86: #{tpu_custom_call.1} parent=5 // pred_check_branch
        %1289 = sbr.rel (%p1287) target = $region88
      $region87: #{tpu_custom_call.1} parent=5 // pred_region
        %s1290 = ssub.s32 %s26, 2
        // Predicated region
        $region89: #{tpu_custom_call.1} parent=87 // pred_check
          %p1291 = pneg %p259
        $region90: #{tpu_custom_call.1} parent=87 // pred_check_branch
          %1293 = sbr.rel (%p1291) target = $region92
        $region91: #{tpu_custom_call.1} parent=87 // pred_region
          %s1294 = sand.u32 %s244, 1
          %s1295 = scalar_lea.sflag [#allocation4], %s1294
          %s1296 = sand.u32 %s244, 1
          %s1297 = smul.addr %s1296, 8
          %s1298 = scalar_lea.vmem [#allocation13], %s1297
          %1299 = dma.done %s1295, 128
        $region92: #{tpu_custom_call.1} parent=87 // pred_fallthru
          _
      $region88: #{tpu_custom_call.1} parent=5 // pred_fallthru
        _
    $region6: #{tpu_custom_call.1} parent=1 // loop_footer
      %s30 = sadd.s32 1, %s26
    $region7: #{tpu_custom_call.1} parent=1 // loop_footer_branch
      %25 = sbr.rel target = $region3
    $region8: #{tpu_custom_call.1} parent=1 // loop_exit
      _
    %1300 = vsyncpa [#allocation3], 1
    %s1301 = scalar_lea.sflag [#allocation3], 1
    %1302 = vsyncpa %s1301, 1
    %1303 = vsyncpa [#allocation6], 1
    %s1304 = scalar_lea.sflag [#allocation6], 1
    %1305 = vsyncpa %s1304, 1
    %1306 = vsyncpa [#allocation9], 1
    %1307 = vsyncpa [#allocation12], 1
    %1308 = vsyncpa [#allocation4], 1
    %s1309 = scalar_lea.sflag [#allocation4], 1
    %1310 = vsyncpa %s1309, 1

</llo_original>
